<compile_context>
chip_gen: v7x
topology: tpu7x:2x2x1
jax: 0.10.0
libtpu: 0.0.40
codegen_flags: <defaults>
</compile_context>

<pallas_src>
import functools
from typing import NamedTuple, Tuple

import jax
import jax.numpy as jnp
from jax.experimental import pallas as pl
from jax.experimental.pallas import tpu as pltpu


# ----------------------------- small helpers ------------------------------- #

def _cdiv(a, b):
    return -(-a // b)


def _round_up(a, m):
    return _cdiv(a, m) * m


def _default_fold():
    """Batch->lane fold factor: 8 fills the 2x256^2 MXU on v6e/v7x, 4 on v5e."""
    try:
        kind = jax.devices()[0].device_kind.lower()
    except Exception:
        return 8
    return 4 if ("v5 lite" in kind or "v5e" in kind or "v5lite" in kind) else 8


def _choose_batch_tile(bf, tb_max=1024):
    """Folded-batch tile: big (up to tb_max), multiple of 8, balanced tails,
    and >= 2 grid steps when possible (v7x megacore)."""
    if bf <= 8:
        return bf                       # block == full dim (tiny batches)
    steps = max(2, _cdiv(bf, tb_max))   # >= 2 parallel steps for dual-TC chips
    tb = _round_up(_cdiv(bf, steps), 8)
    return min(tb, _round_up(bf, 8))


# ----------------------------- fused kernel ------------------------------- #

def _fused_mllfe_kernel(x_ref, *refs, num_layers):
    """h = relu(h @ Wp_l + bp_l) chained over all layers, VMEM-resident."""
    o_ref = refs[-1]
    h = x_ref[...].astype(jnp.float32)
    for l in range(num_layers):                     # static, small
        w = refs[2 * l][...]                        # (G*F_{l-1}, G*F_l), staged once
        b = refs[2 * l + 1][...]                    # (1, G*F_l), f32
        h = jnp.dot(h.astype(w.dtype), w,           # MXU (bf16 or f32)
                    preferred_element_type=jnp.float32)
        h = jnp.maximum(h + b, 0.0)                 # bias + ReLU in f32 on VPU
    o_ref[...] = h.astype(o_ref.dtype)              # single lane-dense store


# --------------------------- weight packing -------------------------------- #

def _pack_layer(w, b, *, stride, row_width, fold, mxu_dtype):
    """Pack `stride` Linear blocks into one matrix, then replicate it
    block-diagonally `fold` times for the batch->lane fold.

    w: (stride, in_dim, out_dim), b: (stride, out_dim).
    Rows ordered (s, i) -> s*in + i (module's reshape);
    columns ordered (o, s) -> o*stride + s (module's transpose+flatten).
    Extra input columns (truncation case) hit zero rows.
    """
    s_, in_dim, out_dim = w.shape
    assert s_ == stride
    eye = jnp.eye(stride, dtype=w.dtype)
    # bd[s*in + i, t*out + o] = w[s, i, o] * (s == t)   (block-diagonal)
    bd = (w[:, :, None, :] * eye[:, None, :, None]).reshape(
        stride * in_dim, stride * out_dim)
    # column permutation: new col (o*stride + s)  <-  old col (s*out + o)
    perm = jnp.arange(stride * out_dim).reshape(stride, out_dim).T.reshape(-1)
    wp = bd[:, perm]
    if row_width > stride * in_dim:   # vector_shape % stride != 0 -> truncation
        wp = jnp.concatenate(
            [wp,
             jnp.zeros((row_width - stride * in_dim, stride * out_dim), w.dtype)],
            axis=0)
    bp = b.T.reshape(1, stride * out_dim)            # bp[0, o*stride+s] = b[s, o]

    out_w = stride * out_dim
    if fold > 1:                                     # batch->lane block-diag fold
        eye_g = jnp.eye(fold, dtype=w.dtype)
        wp = (eye_g[:, None, :, None] * wp[None, :, None, :]).reshape(
            fold * row_width, fold * out_w)
        bp = jnp.tile(bp, (1, fold))
    return wp.astype(mxu_dtype), bp.astype(jnp.float32)


class PackedMLLFE(NamedTuple):
    fold: int
    in_width: int                                    # per-sample input width
    out_width: int                                   # per-sample output width
    weights: Tuple[Tuple[jax.Array, jax.Array], ...]


def pack_mllfe_params(params, *, stride, vector_shape_list, input_width,
                      fold=None, mxu_dtype=jnp.bfloat16):
    """Weight-only preprocessing; do this ONCE at init, not per forward call."""
    if fold is None:
        fold = _default_fold()
    weights = []
    row_width = input_width
    for i, (w, b) in enumerate(params):
        s_, in_dim, out_dim = w.shape
        assert s_ == stride
        assert in_dim == vector_shape_list[i] // stride
        assert row_width >= stride * in_dim, "input narrower than stride*in_dim"
        weights.append(_pack_layer(w, b, stride=stride, row_width=row_width,
                                   fold=fold, mxu_dtype=mxu_dtype))
        row_width = stride * out_dim
    return PackedMLLFE(fold=fold, in_width=input_width,
                       out_width=row_width, weights=tuple(weights))


# ------------------------------ forward ------------------------------------ #

def multi_layer_locally_feature_extraction(x, packed: PackedMLLFE, *,
                                            tb_max=1024):
    """Fused forward.  `packed` comes from pack_mllfe_params (built once)."""
    batch, in_width = x.shape
    assert in_width == packed.in_width
    g = packed.fold
    wf = g * in_width
    out_wf = g * packed.out_width
    num_layers = len(packed.weights)

    # Fold batch into lanes; pad so the folded rows split evenly into tiles.
    bf = _cdiv(batch, g)
    tb = _choose_batch_tile(bf, tb_max)
    steps = _cdiv(bf, tb)
    bf_pad = steps * tb
    b_pad = bf_pad * g
    if b_pad != batch:
        x = jnp.pad(x, ((0, b_pad - batch), (0, 0)))
    xf = x.reshape(bf_pad, wf)                       # lane-dense input slab

    # TODO(synk): if profiling at large batch shows exposed input DMA, set
    # pipeline_mode=pl.Buffered(3) on the x BlockSpec only.
    in_specs = [pl.BlockSpec((tb, wf), lambda i: (i, 0))]
    args = [xf]
    for wp, bp in packed.weights:
        in_specs.append(pl.BlockSpec(wp.shape, lambda i: (0, 0)))   # staged once
        in_specs.append(pl.BlockSpec(bp.shape, lambda i: (0, 0)))
        args.extend([wp, bp])

    kernel = functools.partial(_fused_mllfe_kernel, num_layers=num_layers)
    outf = pl.pallas_call(
        kernel,
        grid=(steps,),
        in_specs=in_specs,
        out_specs=pl.BlockSpec((tb, out_wf), lambda i: (i, 0)),
        out_shape=jax.ShapeDtypeStruct((bf_pad, out_wf), jnp.float32),
        compiler_params=pltpu.CompilerParams(
            dimension_semantics=("parallel",)),
    )(*args)

    out = outf.reshape(b_pad, packed.out_width)      # un-fold lanes -> batch
    return out[:batch] if b_pad != batch else out


# --------------------------- pure-JAX reference ----------------------------- #

def _reference_forward(x, params, *, stride, vector_shape_list):
    """Faithful reproduction of the PyTorch forward for validation."""
    for i, (w, b) in enumerate(params):
        vs = vector_shape_list[i]
        in_dim = vs // stride
        batch = x.shape[0]
        if vs % stride == 0:
            x3 = x.reshape(batch, stride, in_dim)
        else:
            x3 = x[:, :stride * in_dim].reshape(batch, stride, in_dim)
        y = jnp.einsum('bsi,sio->bso', x3, w) + b[None, :, :]
        y = jnp.transpose(y, (0, 2, 1))   # module's BatchNorm == pure transpose
        y = jnp.maximum(y, 0.0)           # ReLU
        x = y.reshape(batch, -1)
    return x


# ------------------------------- init --------------------------------------- #

def init_params(key, stride, vector_shape_list, output_shape_list, num_layers):
    """nn.Linear-shaped params: per layer, `stride` independent Linear(in, out)
    weights stacked as (stride, in, out) plus biases (stride, out)."""
    params = []
    for i in range(num_layers):
        in_dim = vector_shape_list[i] // stride
        out_dim = output_shape_list[i]
        key, kw, kb = jax.random.split(key, 3)
        bound = 1.0 / (in_dim ** 0.5)
        w = jax.random.uniform(kw, (stride, in_dim, out_dim),
                               dtype=jnp.float32, minval=-bound, maxval=bound)
        b = jax.random.uniform(kb, (stride, out_dim),
                               dtype=jnp.float32, minval=-bound, maxval=bound)
        params.append((w, b))
    return params


if __name__ == "__main__":
    stride = 4
    num_layers = 4
    batch = 2
    key = jax.random.PRNGKey(0)

    # case 1: exact division everywhere; case 2: exercises the truncation path
    # (vector_shape % stride != 0 at layer 2 -> last 4 features dropped).
    cases = [
        ("exact",     [32, 64, 48, 64], [16, 12, 16, 8]),
        ("truncated", [32, 64, 46, 64], [16, 12, 16, 8]),
    ]

    fold = _default_fold()
    all_ok = True
    for name, vsl, osl in cases:
        key, kx, kp = jax.random.split(key, 3)
        x = jax.random.normal(kx, (batch, vsl[0]), dtype=jnp.float32)
        params = init_params(kp, stride, vsl, osl, num_layers)
        ref = _reference_forward(x, params, stride=stride,
                                 vector_shape_list=vsl)

        for mxu_dtype, rtol, atol in ((jnp.float32, 1e-4, 1e-4),
                                      (jnp.bfloat16, 5e-2, 5e-2)):
            packed = pack_mllfe_params(params, stride=stride,
                                       vector_shape_list=vsl,
                                       input_width=vsl[0],
                                       fold=fold, mxu_dtype=mxu_dtype)
            out = multi_layer_locally_feature_extraction(x, packed)
            out = jax.block_until_ready(out)
            assert out.shape == (batch, stride * osl[-1]), (name, out.shape)
            if not jnp.allclose(out, ref, rtol=rtol, atol=atol):
                all_ok = False
                print(f"MISMATCH case={name} dtype={mxu_dtype.__name__} "
                      f"max_err={float(jnp.max(jnp.abs(out - ref)))}")

    assert all_ok, "kernel output mismatch vs reference"
    print("KERNEL_OK")
</pallas_src>

<mosaic_0001>
module attributes {stable_mosaic.version = 11 : i64} {
  func.func @_fused_mllfe_kernel(%arg0: i32, %arg1: memref<1x256xf32, #tpu.memory_space<vmem>>, %arg2: memref<256x512xf32, #tpu.memory_space<vmem>>, %arg3: memref<1x512xf32, #tpu.memory_space<vmem>>, %arg4: memref<512x384xf32, #tpu.memory_space<vmem>>, %arg5: memref<1x384xf32, #tpu.memory_space<vmem>>, %arg6: memref<384x512xf32, #tpu.memory_space<vmem>>, %arg7: memref<1x512xf32, #tpu.memory_space<vmem>>, %arg8: memref<512x256xf32, #tpu.memory_space<vmem>>, %arg9: memref<1x256xf32, #tpu.memory_space<vmem>>, %arg10: memref<1x256xf32, #tpu.memory_space<vmem>>) attributes {dimension_semantics = [#tpu.dimension_semantics<parallel>], iteration_bounds = array<i64: 1>, scalar_prefetch = 0 : i64, scratch_operands = 0 : i64, tpu.core_type = #tpu.core_type<tc>, window_params = [{transform_indices = @transform_0, window_bounds = array<i64: 1, 256>}, {pipeline_mode = #tpu.pipeline_mode<synchronous>, transform_indices = @transform_1, window_bounds = array<i64: 256, 512>}, {pipeline_mode = #tpu.pipeline_mode<synchronous>, transform_indices = @transform_2, window_bounds = array<i64: 1, 512>}, {pipeline_mode = #tpu.pipeline_mode<synchronous>, transform_indices = @transform_3, window_bounds = array<i64: 512, 384>}, {pipeline_mode = #tpu.pipeline_mode<synchronous>, transform_indices = @transform_4, window_bounds = array<i64: 1, 384>}, {pipeline_mode = #tpu.pipeline_mode<synchronous>, transform_indices = @transform_5, window_bounds = array<i64: 384, 512>}, {pipeline_mode = #tpu.pipeline_mode<synchronous>, transform_indices = @transform_6, window_bounds = array<i64: 1, 512>}, {pipeline_mode = #tpu.pipeline_mode<synchronous>, transform_indices = @transform_7, window_bounds = array<i64: 512, 256>}, {pipeline_mode = #tpu.pipeline_mode<synchronous>, transform_indices = @transform_8, window_bounds = array<i64: 1, 256>}, {transform_indices = @transform_9, window_bounds = array<i64: 1, 256>}]} {
    %c0 = arith.constant 0 : index
    %c0_0 = arith.constant 0 : index
    %0 = vector.load %arg1[%c0, %c0_0] : memref<1x256xf32, #tpu.memory_space<vmem>>, vector<1x256xf32>
    %c0_1 = arith.constant 0 : index
    %c0_2 = arith.constant 0 : index
    %1 = vector.load %arg2[%c0_1, %c0_2] : memref<256x512xf32, #tpu.memory_space<vmem>>, vector<256x512xf32>
    %c0_3 = arith.constant 0 : index
    %c0_4 = arith.constant 0 : index
    %2 = vector.load %arg3[%c0_3, %c0_4] : memref<1x512xf32, #tpu.memory_space<vmem>>, vector<1x512xf32>
    %cst = arith.constant dense<0.000000e+00> : vector<1x512xf32>
    %3 = tpu.matmul %0, %1, %cst {dimension_numbers = #tpu.dot_dimension_numbers<[1], [0], [0], [1], [0, 0, 1, 1], [], []>} : vector<1x256xf32>, vector<256x512xf32>, vector<1x512xf32> -> vector<1x512xf32>
    %4 = arith.addf %3, %2 : vector<1x512xf32>
    %cst_5 = arith.constant 0.000000e+00 : f32
    %5 = vector.broadcast %cst_5 : f32 to vector<1x512xf32>
    %6 = arith.maximumf %4, %5 : vector<1x512xf32>
    %c0_6 = arith.constant 0 : index
    %c0_7 = arith.constant 0 : index
    %7 = vector.load %arg4[%c0_6, %c0_7] : memref<512x384xf32, #tpu.memory_space<vmem>>, vector<512x384xf32>
    %c0_8 = arith.constant 0 : index
    %c0_9 = arith.constant 0 : index
    %8 = vector.load %arg5[%c0_8, %c0_9] : memref<1x384xf32, #tpu.memory_space<vmem>>, vector<1x384xf32>
    %cst_10 = arith.constant dense<0.000000e+00> : vector<1x384xf32>
    %9 = tpu.matmul %6, %7, %cst_10 {dimension_numbers = #tpu.dot_dimension_numbers<[1], [0], [0], [1], [0, 0, 1, 1], [], []>} : vector<1x512xf32>, vector<512x384xf32>, vector<1x384xf32> -> vector<1x384xf32>
    %10 = arith.addf %9, %8 : vector<1x384xf32>
    %cst_11 = arith.constant 0.000000e+00 : f32
    %11 = vector.broadcast %cst_11 : f32 to vector<1x384xf32>
    %12 = arith.maximumf %10, %11 : vector<1x384xf32>
    %c0_12 = arith.constant 0 : index
    %c0_13 = arith.constant 0 : index
    %13 = vector.load %arg6[%c0_12, %c0_13] : memref<384x512xf32, #tpu.memory_space<vmem>>, vector<384x512xf32>
    %c0_14 = arith.constant 0 : index
    %c0_15 = arith.constant 0 : index
    %14 = vector.load %arg7[%c0_14, %c0_15] : memref<1x512xf32, #tpu.memory_space<vmem>>, vector<1x512xf32>
    %cst_16 = arith.constant dense<0.000000e+00> : vector<1x512xf32>
    %15 = tpu.matmul %12, %13, %cst_16 {dimension_numbers = #tpu.dot_dimension_numbers<[1], [0], [0], [1], [0, 0, 1, 1], [], []>} : vector<1x384xf32>, vector<384x512xf32>, vector<1x512xf32> -> vector<1x512xf32>
    %16 = arith.addf %15, %14 : vector<1x512xf32>
    %cst_17 = arith.constant 0.000000e+00 : f32
    %17 = vector.broadcast %cst_17 : f32 to vector<1x512xf32>
    %18 = arith.maximumf %16, %17 : vector<1x512xf32>
    %c0_18 = arith.constant 0 : index
    %c0_19 = arith.constant 0 : index
    %19 = vector.load %arg8[%c0_18, %c0_19] : memref<512x256xf32, #tpu.memory_space<vmem>>, vector<512x256xf32>
    %c0_20 = arith.constant 0 : index
    %c0_21 = arith.constant 0 : index
    %20 = vector.load %arg9[%c0_20, %c0_21] : memref<1x256xf32, #tpu.memory_space<vmem>>, vector<1x256xf32>
    %cst_22 = arith.constant dense<0.000000e+00> : vector<1x256xf32>
    %21 = tpu.matmul %18, %19, %cst_22 {dimension_numbers = #tpu.dot_dimension_numbers<[1], [0], [0], [1], [0, 0, 1, 1], [], []>} : vector<1x512xf32>, vector<512x256xf32>, vector<1x256xf32> -> vector<1x256xf32>
    %22 = arith.addf %21, %20 : vector<1x256xf32>
    %cst_23 = arith.constant 0.000000e+00 : f32
    %23 = vector.broadcast %cst_23 : f32 to vector<1x256xf32>
    %24 = arith.maximumf %22, %23 : vector<1x256xf32>
    %c0_24 = arith.constant 0 : index
    %c0_25 = arith.constant 0 : index
    %25 = vector.load %arg10[%c0_24, %c0_25] : memref<1x256xf32, #tpu.memory_space<vmem>>, vector<1x256xf32>
    tpu.vector_store %arg10[%c0_24, %c0_25], %24 {strides = array<i32>} : memref<1x256xf32, #tpu.memory_space<vmem>>, vector<1x256xf32>,
    return
  }
  func.func @transform_0(%arg0: i32) -> (i32, i32) {
    %c0_i32 = arith.constant 0 : i32
    %c0_i32_0 = arith.constant 0 : i32
    return %arg0, %c0_i32 : i32, i32
  }
  func.func @transform_1(%arg0: i32) -> (i32, i32) {
    %c0_i32 = arith.constant 0 : i32
    %c0_i32_0 = arith.constant 0 : i32
    %c0_i32_1 = arith.constant 0 : i32
    return %c0_i32, %c0_i32_0 : i32, i32
  }
  func.func @transform_2(%arg0: i32) -> (i32, i32) {
    %c0_i32 = arith.constant 0 : i32
    %c0_i32_0 = arith.constant 0 : i32
    %c0_i32_1 = arith.constant 0 : i32
    return %c0_i32, %c0_i32_0 : i32, i32
  }
  func.func @transform_3(%arg0: i32) -> (i32, i32) {
    %c0_i32 = arith.constant 0 : i32
    %c0_i32_0 = arith.constant 0 : i32
    %c0_i32_1 = arith.constant 0 : i32
    return %c0_i32, %c0_i32_0 : i32, i32
  }
  func.func @transform_4(%arg0: i32) -> (i32, i32) {
    %c0_i32 = arith.constant 0 : i32
    %c0_i32_0 = arith.constant 0 : i32
    %c0_i32_1 = arith.constant 0 : i32
    return %c0_i32, %c0_i32_0 : i32, i32
  }
  func.func @transform_5(%arg0: i32) -> (i32, i32) {
    %c0_i32 = arith.constant 0 : i32
    %c0_i32_0 = arith.constant 0 : i32
    %c0_i32_1 = arith.constant 0 : i32
    return %c0_i32, %c0_i32_0 : i32, i32
  }
  func.func @transform_6(%arg0: i32) -> (i32, i32) {
    %c0_i32 = arith.constant 0 : i32
    %c0_i32_0 = arith.constant 0 : i32
    %c0_i32_1 = arith.constant 0 : i32
    return %c0_i32, %c0_i32_0 : i32, i32
  }
  func.func @transform_7(%arg0: i32) -> (i32, i32) {
    %c0_i32 = arith.constant 0 : i32
    %c0_i32_0 = arith.constant 0 : i32
    %c0_i32_1 = arith.constant 0 : i32
    return %c0_i32, %c0_i32_0 : i32, i32
  }
  func.func @transform_8(%arg0: i32) -> (i32, i32) {
    %c0_i32 = arith.constant 0 : i32
    %c0_i32_0 = arith.constant 0 : i32
    %c0_i32_1 = arith.constant 0 : i32
    return %c0_i32, %c0_i32_0 : i32, i32
  }
  func.func @transform_9(%arg0: i32) -> (i32, i32) {
    %c0_i32 = arith.constant 0 : i32
    %c0_i32_0 = arith.constant 0 : i32
    return %arg0, %c0_i32 : i32, i32
  }
}

</mosaic_0001>

<llo_original>
// kernel: tpu_custom_call.1
$region0: #{tpu_custom_call.1}
  #allocation0 [shape = 'u32[]', space=smem, size = 0x4, offset = 0x4, fixed_abs, tag = 'smem constant byte address 0x4 - core index']
  #allocation1 [shape = 'u32[144,128]{1,0:T(1,128)}', space=vmem, size = 0x12000, scoped, tag = 'internal scratch']
  %s0 = inlined_call_operand.hbm [shape: f32[1,256], index: 0, kind: input, shape index: {}]
  %s1 = inlined_call_operand.hbm [shape: f32[256,512], index: 1, kind: input, shape index: {}]
  %s2 = inlined_call_operand.vmem [shape: f32[1,512], index: 2, kind: input, shape index: {}]
  %s3 = inlined_call_operand.hbm [shape: f32[512,384], index: 3, kind: input, shape index: {}]
  %s4 = inlined_call_operand.vmem [shape: f32[1,384], index: 4, kind: input, shape index: {}]
  %s5 = inlined_call_operand.hbm [shape: f32[384,512], index: 5, kind: input, shape index: {}]
  %s6 = inlined_call_operand.vmem [shape: f32[1,512], index: 6, kind: input, shape index: {}]
  %s7 = inlined_call_operand.hbm [shape: f32[512,256], index: 7, kind: input, shape index: {}]
  %s8 = inlined_call_operand.vmem [shape: f32[1,256], index: 8, kind: input, shape index: {}]
  %s9 = inlined_call_operand.hbm [shape: f32[1,256], index: 9, kind: output, shape index: {}]
  %s10 = sld [smem:[#allocation0]]
  $region66: #{tpu_custom_call.1} parent=0
    _
  %s12 = ssub.s32 1, %s10
  %s13 = scalar_select 0, %s12, %s10
  $region1: #{tpu_custom_call.1} parent=0
    #allocation2 [shape = 'u8[1024]{0}', space=vmem, size = 0x400, scoped, tag = 'input window, operand 0, single buffered']
    #allocation3 [shape = 's32[1]{0}', space=sflag, size = 0x4, scoped, tag = 'scoped memory for tpu_custom_call.1']
    #allocation4 [shape = 's32[1]{0}', space=sflag, size = 0x4, scoped, tag = 'scoped memory for tpu_custom_call.1']
    #allocation5 [shape = 'u8[524288]{0}', space=vmem, size = 0x80000, scoped, tag = 'input window, operand 1, single buffered']
    #allocation6 [shape = 's32[1]{0}', space=sflag, size = 0x4, scoped, tag = 'scoped memory for tpu_custom_call.1']
    #allocation7 [shape = 'u8[786432]{0}', space=vmem, size = 0xc0000, scoped, tag = 'input window, operand 3, single buffered']
    #allocation8 [shape = 'u8[786432]{0}', space=vmem, size = 0xc0000, scoped, tag = 'input window, operand 5, single buffered']
    #allocation9 [shape = 's32[1]{0}', space=sflag, size = 0x4, scoped, tag = 'scoped memory for tpu_custom_call.1']
    #allocation10 [shape = 'u8[524288]{0}', space=vmem, size = 0x80000, scoped, tag = 'input window, operand 7, single buffered']
    #allocation11 [shape = 'u8[1024]{0}', space=vmem, size = 0x400, scoped, tag = 'output window, operand 0, single buffered']
    %14 = vsyncpa [#allocation3], 0
    %15 = vsyncpa [#allocation6], 0
    %16 = vsyncpa [#allocation9], 0
    %17 = vsyncpa [#allocation4], 0
    // Predicated region
    $region2: #{tpu_custom_call.1} parent=1 // pred_check
      _
    $region3: #{tpu_custom_call.1} parent=1 // pred_check_branch
      %19 = sbr.rel (0) target = $region5
    $region4: #{tpu_custom_call.1} parent=1 // pred_region
      %s21 = ssub.s32 32, 32
      %22 = vsyncadd [#allocation3], %s21
      %s24 = sshll.u32 [#allocation2], 4
      %s25 = int_to_ptr.vmem [resolvable:$true] %s24
      %27 = dma.hbm_to_vmem [thread:$0]  %s0, 32, %s25, [#allocation3]
    $region5: #{tpu_custom_call.1} parent=1 // pred_fallthru
      _
    // Predicated region
    $region6: #{tpu_custom_call.1} parent=1 // pred_check
      _
    $region7: #{tpu_custom_call.1} parent=1 // pred_check_branch
      %29 = sbr.rel (0) target = $region9
    $region8: #{tpu_custom_call.1} parent=1 // pred_region
      %s31 = ssub.s32 16384, 16384
      %32 = vsyncadd [#allocation6], %s31
      %s33 = sshll.u32 [#allocation5], 4
      %s34 = int_to_ptr.vmem [resolvable:$true] %s33
      %39 = dma.hbm_to_vmem [thread:$0]  %s1, 16384, %s34, [#allocation6], 512, 512, 32
    $region9: #{tpu_custom_call.1} parent=1 // pred_fallthru
      _
    // Predicated region
    $region10: #{tpu_custom_call.1} parent=1 // pred_check
      _
    $region11: #{tpu_custom_call.1} parent=1 // pred_check_branch
      %41 = sbr.rel (0) target = $region13
    $region12: #{tpu_custom_call.1} parent=1 // pred_region
      _
    $region13: #{tpu_custom_call.1} parent=1 // pred_fallthru
      _
    // Predicated region
    $region14: #{tpu_custom_call.1} parent=1 // pred_check
      _
    $region15: #{tpu_custom_call.1} parent=1 // pred_check_branch
      %43 = sbr.rel (0) target = $region17
    $region16: #{tpu_custom_call.1} parent=1 // pred_region
      %s45 = ssub.s32 24576, 24576
      %46 = vsyncadd [#allocation6], %s45
      %s47 = sshll.u32 [#allocation7], 4
      %s48 = int_to_ptr.vmem [resolvable:$true] %s47
      %53 = dma.hbm_to_vmem [thread:$0]  %s3, 24576, %s48, [#allocation6], 384, 384, 24
    $region17: #{tpu_custom_call.1} parent=1 // pred_fallthru
      _
    // Predicated region
    $region18: #{tpu_custom_call.1} parent=1 // pred_check
      _
    $region19: #{tpu_custom_call.1} parent=1 // pred_check_branch
      %55 = sbr.rel (0) target = $region21
    $region20: #{tpu_custom_call.1} parent=1 // pred_region
      _
    $region21: #{tpu_custom_call.1} parent=1 // pred_fallthru
      _
    // Predicated region
    $region22: #{tpu_custom_call.1} parent=1 // pred_check
      _
    $region23: #{tpu_custom_call.1} parent=1 // pred_check_branch
      %57 = sbr.rel (0) target = $region25
    $region24: #{tpu_custom_call.1} parent=1 // pred_region
      %s59 = ssub.s32 24576, 24576
      %60 = vsyncadd [#allocation9], %s59
      %s61 = sshll.u32 [#allocation8], 4
      %s62 = int_to_ptr.vmem [resolvable:$true] %s61
      %67 = dma.hbm_to_vmem [thread:$0]  %s5, 24576, %s62, [#allocation9], 512, 512, 32
    $region25: #{tpu_custom_call.1} parent=1 // pred_fallthru
      _
    // Predicated region
    $region26: #{tpu_custom_call.1} parent=1 // pred_check
      _
    $region27: #{tpu_custom_call.1} parent=1 // pred_check_branch
      %69 = sbr.rel (0) target = $region29
    $region28: #{tpu_custom_call.1} parent=1 // pred_region
      _
    $region29: #{tpu_custom_call.1} parent=1 // pred_fallthru
      _
    // Predicated region
    $region30: #{tpu_custom_call.1} parent=1 // pred_check
      _
    $region31: #{tpu_custom_call.1} parent=1 // pred_check_branch
      %71 = sbr.rel (0) target = $region33
    $region32: #{tpu_custom_call.1} parent=1 // pred_region
      %s73 = ssub.s32 16384, 16384
      %74 = vsyncadd [#allocation9], %s73
      %s75 = sshll.u32 [#allocation10], 4
      %s76 = int_to_ptr.vmem [resolvable:$true] %s75
      %81 = dma.hbm_to_vmem [thread:$0]  %s7, 16384, %s76, [#allocation9], 256, 256, 16
    $region33: #{tpu_custom_call.1} parent=1 // pred_fallthru
      _
    // Predicated region
    $region34: #{tpu_custom_call.1} parent=1 // pred_check
      _
    $region35: #{tpu_custom_call.1} parent=1 // pred_check_branch
      %83 = sbr.rel (0) target = $region37
    $region36: #{tpu_custom_call.1} parent=1 // pred_region
      _
    $region37: #{tpu_custom_call.1} parent=1 // pred_fallthru
      _
    // Predicated region
    $region38: #{tpu_custom_call.1} parent=1 // pred_check
      _
    $region39: #{tpu_custom_call.1} parent=1 // pred_check_branch
      %85 = sbr.rel (0) target = $region41
    $region40: #{tpu_custom_call.1} parent=1 // pred_region
      %86 = dma.done [#allocation3], 32
    $region41: #{tpu_custom_call.1} parent=1 // pred_fallthru
      _
    // Predicated region
    $region42: #{tpu_custom_call.1} parent=1 // pred_check
      _
    $region43: #{tpu_custom_call.1} parent=1 // pred_check_branch
      %88 = sbr.rel (0) target = $region45
    $region44: #{tpu_custom_call.1} parent=1 // pred_region
      %89 = dma.done [#allocation6], 16384
    $region45: #{tpu_custom_call.1} parent=1 // pred_fallthru
      _
    // Predicated region
    $region46: #{tpu_custom_call.1} parent=1 // pred_check
      _
    $region47: #{tpu_custom_call.1} parent=1 // pred_check_branch
      %91 = sbr.rel (0) target = $region49
    $region48: #{tpu_custom_call.1} parent=1 // pred_region
      %92 = dma.done [#allocation6], 24576
    $region49: #{tpu_custom_call.1} parent=1 // pred_fallthru
      _
    // Predicated region
    $region50: #{tpu_custom_call.1} parent=1 // pred_check
      _
    $region51: #{tpu_custom_call.1} parent=1 // pred_check_branch
      %94 = sbr.rel (0) target = $region53
    $region52: #{tpu_custom_call.1} parent=1 // pred_region
      %95 = dma.done [#allocation9], 24576
    $region53: #{tpu_custom_call.1} parent=1 // pred_fallthru
      _
    // Predicated region
    $region54: #{tpu_custom_call.1} parent=1 // pred_check
      _
    $region55: #{tpu_custom_call.1} parent=1 // pred_check_branch
      %97 = sbr.rel (0) target = $region57
    $region56: #{tpu_custom_call.1} parent=1 // pred_region
      %98 = dma.done [#allocation9], 16384
    $region57: #{tpu_custom_call.1} parent=1 // pred_fallthru
      _
    %v99 = vld [vmem:[#allocation2] sm:$0x3]
    %v100 = vld [vmem:[#allocation5] sm:$0xff]
    %v101 = vld [vmem:[#allocation5 + $0x8] sm:$0xff]
    %v102 = vld [vmem:[#allocation5 + $0x10] sm:$0xff]
    %v103 = vld [vmem:[#allocation5 + $0x18] sm:$0xff]
    %v104 = vld [vmem:[#allocation5 + $0x20] sm:$0xff]
    %v105 = vld [vmem:[#allocation5 + $0x28] sm:$0xff]
    %v106 = vld [vmem:[#allocation5 + $0x30] sm:$0xff]
    %v107 = vld [vmem:[#allocation5 + $0x38] sm:$0xff]
    %v108 = vld [vmem:[#allocation5 + $0x40] sm:$0xff]
    %v109 = vld [vmem:[#allocation5 + $0x48] sm:$0xff]
    %v110 = vld [vmem:[#allocation5 + $0x50] sm:$0xff]
    %v111 = vld [vmem:[#allocation5 + $0x58] sm:$0xff]
    %v112 = vld [vmem:[#allocation5 + $0x60] sm:$0xff]
    %v113 = vld [vmem:[#allocation5 + $0x68] sm:$0xff]
    %v114 = vld [vmem:[#allocation5 + $0x70] sm:$0xff]
    %v115 = vld [vmem:[#allocation5 + $0x78] sm:$0xff]
    %v116 = vld [vmem:[#allocation5 + $0x80] sm:$0xff]
    %v117 = vld [vmem:[#allocation5 + $0x88] sm:$0xff]
    %v118 = vld [vmem:[#allocation5 + $0x90] sm:$0xff]
    %v119 = vld [vmem:[#allocation5 + $0x98] sm:$0xff]
    %v120 = vld [vmem:[#allocation5 + $0xa0] sm:$0xff]
    %v121 = vld [vmem:[#allocation5 + $0xa8] sm:$0xff]
    %v122 = vld [vmem:[#allocation5 + $0xb0] sm:$0xff]
    %v123 = vld [vmem:[#allocation5 + $0xb8] sm:$0xff]
    %v124 = vld [vmem:[#allocation5 + $0xc0] sm:$0xff]
    %v125 = vld [vmem:[#allocation5 + $0xc8] sm:$0xff]
    %v126 = vld [vmem:[#allocation5 + $0xd0] sm:$0xff]
    %v127 = vld [vmem:[#allocation5 + $0xd8] sm:$0xff]
    %v128 = vld [vmem:[#allocation5 + $0xe0] sm:$0xff]
    %v129 = vld [vmem:[#allocation5 + $0xe8] sm:$0xff]
    %v130 = vld [vmem:[#allocation5 + $0xf0] sm:$0xff]
    %v131 = vld [vmem:[#allocation5 + $0xf8] sm:$0xff]
    %v132 = vld [vmem:[#allocation5 + $0x100] sm:$0xff]
    %v133 = vld [vmem:[#allocation5 + $0x108] sm:$0xff]
    %v134 = vld [vmem:[#allocation5 + $0x110] sm:$0xff]
    %v135 = vld [vmem:[#allocation5 + $0x118] sm:$0xff]
    %v136 = vld [vmem:[#allocation5 + $0x120] sm:$0xff]
    %v137 = vld [vmem:[#allocation5 + $0x128] sm:$0xff]
    %v138 = vld [vmem:[#allocation5 + $0x130] sm:$0xff]
    %v139 = vld [vmem:[#allocation5 + $0x138] sm:$0xff]
    %v140 = vld [vmem:[#allocation5 + $0x140] sm:$0xff]
    %v141 = vld [vmem:[#allocation5 + $0x148] sm:$0xff]
    %v142 = vld [vmem:[#allocation5 + $0x150] sm:$0xff]
    %v143 = vld [vmem:[#allocation5 + $0x158] sm:$0xff]
    %v144 = vld [vmem:[#allocation5 + $0x160] sm:$0xff]
    %v145 = vld [vmem:[#allocation5 + $0x168] sm:$0xff]
    %v146 = vld [vmem:[#allocation5 + $0x170] sm:$0xff]
    %v147 = vld [vmem:[#allocation5 + $0x178] sm:$0xff]
    %v148 = vld [vmem:[#allocation5 + $0x180] sm:$0xff]
    %v149 = vld [vmem:[#allocation5 + $0x188] sm:$0xff]
    %v150 = vld [vmem:[#allocation5 + $0x190] sm:$0xff]
    %v151 = vld [vmem:[#allocation5 + $0x198] sm:$0xff]
    %v152 = vld [vmem:[#allocation5 + $0x1a0] sm:$0xff]
    %v153 = vld [vmem:[#allocation5 + $0x1a8] sm:$0xff]
    %v154 = vld [vmem:[#allocation5 + $0x1b0] sm:$0xff]
    %v155 = vld [vmem:[#allocation5 + $0x1b8] sm:$0xff]
    %v156 = vld [vmem:[#allocation5 + $0x1c0] sm:$0xff]
    %v157 = vld [vmem:[#allocation5 + $0x1c8] sm:$0xff]
    %v158 = vld [vmem:[#allocation5 + $0x1d0] sm:$0xff]
    %v159 = vld [vmem:[#allocation5 + $0x1d8] sm:$0xff]
    %v160 = vld [vmem:[#allocation5 + $0x1e0] sm:$0xff]
    %v161 = vld [vmem:[#allocation5 + $0x1e8] sm:$0xff]
    %v162 = vld [vmem:[#allocation5 + $0x1f0] sm:$0xff]
    %v163 = vld [vmem:[#allocation5 + $0x1f8] sm:$0xff]
    %v164 = vld [vmem:[#allocation5 + $0x200] sm:$0xff]
    %v165 = vld [vmem:[#allocation5 + $0x208] sm:$0xff]
    %v166 = vld [vmem:[#allocation5 + $0x210] sm:$0xff]
    %v167 = vld [vmem:[#allocation5 + $0x218] sm:$0xff]
    %v168 = vld [vmem:[#allocation5 + $0x220] sm:$0xff]
    %v169 = vld [vmem:[#allocation5 + $0x228] sm:$0xff]
    %v170 = vld [vmem:[#allocation5 + $0x230] sm:$0xff]
    %v171 = vld [vmem:[#allocation5 + $0x238] sm:$0xff]
    %v172 = vld [vmem:[#allocation5 + $0x240] sm:$0xff]
    %v173 = vld [vmem:[#allocation5 + $0x248] sm:$0xff]
    %v174 = vld [vmem:[#allocation5 + $0x250] sm:$0xff]
    %v175 = vld [vmem:[#allocation5 + $0x258] sm:$0xff]
    %v176 = vld [vmem:[#allocation5 + $0x260] sm:$0xff]
    %v177 = vld [vmem:[#allocation5 + $0x268] sm:$0xff]
    %v178 = vld [vmem:[#allocation5 + $0x270] sm:$0xff]
    %v179 = vld [vmem:[#allocation5 + $0x278] sm:$0xff]
    %v180 = vld [vmem:[#allocation5 + $0x280] sm:$0xff]
    %v181 = vld [vmem:[#allocation5 + $0x288] sm:$0xff]
    %v182 = vld [vmem:[#allocation5 + $0x290] sm:$0xff]
    %v183 = vld [vmem:[#allocation5 + $0x298] sm:$0xff]
    %v184 = vld [vmem:[#allocation5 + $0x2a0] sm:$0xff]
    %v185 = vld [vmem:[#allocation5 + $0x2a8] sm:$0xff]
    %v186 = vld [vmem:[#allocation5 + $0x2b0] sm:$0xff]
    %v187 = vld [vmem:[#allocation5 + $0x2b8] sm:$0xff]
    %v188 = vld [vmem:[#allocation5 + $0x2c0] sm:$0xff]
    %v189 = vld [vmem:[#allocation5 + $0x2c8] sm:$0xff]
    %v190 = vld [vmem:[#allocation5 + $0x2d0] sm:$0xff]
    %v191 = vld [vmem:[#allocation5 + $0x2d8] sm:$0xff]
    %v192 = vld [vmem:[#allocation5 + $0x2e0] sm:$0xff]
    %v193 = vld [vmem:[#allocation5 + $0x2e8] sm:$0xff]
    %v194 = vld [vmem:[#allocation5 + $0x2f0] sm:$0xff]
    %v195 = vld [vmem:[#allocation5 + $0x2f8] sm:$0xff]
    %v196 = vld [vmem:[#allocation5 + $0x300] sm:$0xff]
    %v197 = vld [vmem:[#allocation5 + $0x308] sm:$0xff]
    %v198 = vld [vmem:[#allocation5 + $0x310] sm:$0xff]
    %v199 = vld [vmem:[#allocation5 + $0x318] sm:$0xff]
    %v200 = vld [vmem:[#allocation5 + $0x320] sm:$0xff]
    %v201 = vld [vmem:[#allocation5 + $0x328] sm:$0xff]
    %v202 = vld [vmem:[#allocation5 + $0x330] sm:$0xff]
    %v203 = vld [vmem:[#allocation5 + $0x338] sm:$0xff]
    %v204 = vld [vmem:[#allocation5 + $0x340] sm:$0xff]
    %v205 = vld [vmem:[#allocation5 + $0x348] sm:$0xff]
    %v206 = vld [vmem:[#allocation5 + $0x350] sm:$0xff]
    %v207 = vld [vmem:[#allocation5 + $0x358] sm:$0xff]
    %v208 = vld [vmem:[#allocation5 + $0x360] sm:$0xff]
    %v209 = vld [vmem:[#allocation5 + $0x368] sm:$0xff]
    %v210 = vld [vmem:[#allocation5 + $0x370] sm:$0xff]
    %v211 = vld [vmem:[#allocation5 + $0x378] sm:$0xff]
    %v212 = vld [vmem:[#allocation5 + $0x380] sm:$0xff]
    %v213 = vld [vmem:[#allocation5 + $0x388] sm:$0xff]
    %v214 = vld [vmem:[#allocation5 + $0x390] sm:$0xff]
    %v215 = vld [vmem:[#allocation5 + $0x398] sm:$0xff]
    %v216 = vld [vmem:[#allocation5 + $0x3a0] sm:$0xff]
    %v217 = vld [vmem:[#allocation5 + $0x3a8] sm:$0xff]
    %v218 = vld [vmem:[#allocation5 + $0x3b0] sm:$0xff]
    %v219 = vld [vmem:[#allocation5 + $0x3b8] sm:$0xff]
    %v220 = vld [vmem:[#allocation5 + $0x3c0] sm:$0xff]
    %v221 = vld [vmem:[#allocation5 + $0x3c8] sm:$0xff]
    %v222 = vld [vmem:[#allocation5 + $0x3d0] sm:$0xff]
    %v223 = vld [vmem:[#allocation5 + $0x3d8] sm:$0xff]
    %v224 = vld [vmem:[#allocation5 + $0x3e0] sm:$0xff]
    %v225 = vld [vmem:[#allocation5 + $0x3e8] sm:$0xff]
    %v226 = vld [vmem:[#allocation5 + $0x3f0] sm:$0xff]
    %v227 = vld [vmem:[#allocation5 + $0x3f8] sm:$0xff]
    %v228 = vld [vmem:[%s2] sm:$0xf]
    %v230 = vlaneseq
    %v231 = vshrl.u32 %v230, 7
    %v232 = vsub.s32 0, %v231
    %v233 = vrot.slane %v99, %v232
    %v234 = vlaneseq
    %v235 = vshrl.u32 %v234, 7
    %v236 = vsub.s32 1, %v235
    %v237 = vrot.slane %v99, %v236
    %v241 = vlaneseq
    %v242 = vshrl.u32 %v241, 7
    %v243 = vsub.s32 0, %v242
    %v244 = vrot.slane %v228, %v243
    %v245 = vlaneseq
    %v246 = vshrl.u32 %v245, 7
    %v247 = vsub.s32 1, %v246
    %v248 = vrot.slane %v228, %v247
    %v249 = vlaneseq
    %v250 = vshrl.u32 %v249, 7
    %v251 = vsub.s32 2, %v250
    %v252 = vrot.slane %v228, %v251
    %v253 = vlaneseq
    %v254 = vshrl.u32 %v253, 7
    %v255 = vsub.s32 3, %v254
    %v256 = vrot.slane %v228, %v255
    %261 = vmatprep.subr.mxu0 %v101
    %262 = vmatpush1.msra.mxu0 %v100
    %263 = vmatprep.subr.mxu0 %v105
    %264 = vmatpush1.msra.mxu0 %v104
    %265 = vmatprep.subr.mxu0 %v109
    %266 = vmatpush1.msra.mxu0 %v108
    %267 = vmatprep.subr.mxu0 %v113
    %268 = vmatpush1.msra.mxu0 %v112
    %269 = vmatprep.subr.mxu0 %v117
    %270 = vmatpush1.msra.mxu0 %v116
    %271 = vmatprep.subr.mxu0 %v121
    %272 = vmatpush1.msra.mxu0 %v120
    %273 = vmatprep.subr.mxu0 %v125
    %274 = vmatpush1.msra.mxu0 %v124
    %275 = vmatprep.subr.mxu0 %v129
    %276 = vmatpush1.msra.mxu0 %v128
    %277 = vmatprep.subr.mxu0 %v133
    %278 = vmatpush1.msra.mxu0 %v132
    %279 = vmatprep.subr.mxu0 %v137
    %280 = vmatpush1.msra.mxu0 %v136
    %281 = vmatprep.subr.mxu0 %v141
    %282 = vmatpush1.msra.mxu0 %v140
    %283 = vmatprep.subr.mxu0 %v145
    %284 = vmatpush1.msra.mxu0 %v144
    %285 = vmatprep.subr.mxu0 %v149
    %286 = vmatpush1.msra.mxu0 %v148
    %287 = vmatprep.subr.mxu0 %v153
    %288 = vmatpush1.msra.mxu0 %v152
    %289 = vmatprep.subr.mxu0 %v157
    %290 = vmatpush1.msra.mxu0 %v156
    %291 = vmatprep.subr.mxu0 %v161
    %292 = vmatpush1.msra.mxu0 %v160
    %293 = vmatprep.subr.mxu0 %v165
    %294 = vmatpush1.msra.mxu0 %v164
    %295 = vmatprep.subr.mxu0 %v169
    %296 = vmatpush1.msra.mxu0 %v168
    %297 = vmatprep.subr.mxu0 %v173
    %298 = vmatpush1.msra.mxu0 %v172
    %299 = vmatprep.subr.mxu0 %v177
    %300 = vmatpush1.msra.mxu0 %v176
    %301 = vmatprep.subr.mxu0 %v181
    %302 = vmatpush1.msra.mxu0 %v180
    %303 = vmatprep.subr.mxu0 %v185
    %304 = vmatpush1.msra.mxu0 %v184
    %305 = vmatprep.subr.mxu0 %v189
    %306 = vmatpush1.msra.mxu0 %v188
    %307 = vmatprep.subr.mxu0 %v193
    %308 = vmatpush1.msra.mxu0 %v192
    %309 = vmatprep.subr.mxu0 %v197
    %310 = vmatpush1.msra.mxu0 %v196
    %311 = vmatprep.subr.mxu0 %v201
    %312 = vmatpush1.msra.mxu0 %v200
    %313 = vmatprep.subr.mxu0 %v205
    %314 = vmatpush1.msra.mxu0 %v204
    %315 = vmatprep.subr.mxu0 %v209
    %316 = vmatpush1.msra.mxu0 %v208
    %317 = vmatprep.subr.mxu0 %v213
    %318 = vmatpush1.msra.mxu0 %v212
    %319 = vmatprep.subr.mxu0 %v217
    %320 = vmatpush1.msra.mxu0 %v216
    %321 = vmatprep.subr.mxu0 %v221
    %322 = vmatpush1.msra.mxu0 %v220
    %323 = vmatprep.subr.mxu0 %v225
    %324 = vmatpush1.msra.mxu0 %v224
    %325 = vmatprep.mubr.f32.mxu0 %v237
    %326 = vmatmul.mubr.f32.gmra.mrb[0].mxu0 %v233
    %v327 = vpop.f32.mrb[0].mxu0
    %v328 = vadd.f32 %v244, %v327
    %v329 = vpop.f32.mrb[0].mxu0
    %v330 = vadd.f32 %v248, %v329
    %331 = vdwg.mxu0
    %332 = vmatprep.subr.mxu0 %v103
    %333 = vmatpush1.msra.mxu0 %v102
    %334 = vmatprep.subr.mxu0 %v107
    %335 = vmatpush1.msra.mxu0 %v106
    %336 = vmatprep.subr.mxu0 %v111
    %337 = vmatpush1.msra.mxu0 %v110
    %338 = vmatprep.subr.mxu0 %v115
    %339 = vmatpush1.msra.mxu0 %v114
    %340 = vmatprep.subr.mxu0 %v119
    %341 = vmatpush1.msra.mxu0 %v118
    %342 = vmatprep.subr.mxu0 %v123
    %343 = vmatpush1.msra.mxu0 %v122
    %344 = vmatprep.subr.mxu0 %v127
    %345 = vmatpush1.msra.mxu0 %v126
    %346 = vmatprep.subr.mxu0 %v131
    %347 = vmatpush1.msra.mxu0 %v130
    %348 = vmatprep.subr.mxu0 %v135
    %349 = vmatpush1.msra.mxu0 %v134
    %350 = vmatprep.subr.mxu0 %v139
    %351 = vmatpush1.msra.mxu0 %v138
    %352 = vmatprep.subr.mxu0 %v143
    %353 = vmatpush1.msra.mxu0 %v142
    %354 = vmatprep.subr.mxu0 %v147
    %355 = vmatpush1.msra.mxu0 %v146
    %356 = vmatprep.subr.mxu0 %v151
    %357 = vmatpush1.msra.mxu0 %v150
    %358 = vmatprep.subr.mxu0 %v155
    %359 = vmatpush1.msra.mxu0 %v154
    %360 = vmatprep.subr.mxu0 %v159
    %361 = vmatpush1.msra.mxu0 %v158
    %362 = vmatprep.subr.mxu0 %v163
    %363 = vmatpush1.msra.mxu0 %v162
    %364 = vmatprep.subr.mxu0 %v167
    %365 = vmatpush1.msra.mxu0 %v166
    %366 = vmatprep.subr.mxu0 %v171
    %367 = vmatpush1.msra.mxu0 %v170
    %368 = vmatprep.subr.mxu0 %v175
    %369 = vmatpush1.msra.mxu0 %v174
    %370 = vmatprep.subr.mxu0 %v179
    %371 = vmatpush1.msra.mxu0 %v178
    %372 = vmatprep.subr.mxu0 %v183
    %373 = vmatpush1.msra.mxu0 %v182
    %374 = vmatprep.subr.mxu0 %v187
    %375 = vmatpush1.msra.mxu0 %v186
    %376 = vmatprep.subr.mxu0 %v191
    %377 = vmatpush1.msra.mxu0 %v190
    %378 = vmatprep.subr.mxu0 %v195
    %379 = vmatpush1.msra.mxu0 %v194
    %380 = vmatprep.subr.mxu0 %v199
    %381 = vmatpush1.msra.mxu0 %v198
    %382 = vmatprep.subr.mxu0 %v203
    %383 = vmatpush1.msra.mxu0 %v202
    %384 = vmatprep.subr.mxu0 %v207
    %385 = vmatpush1.msra.mxu0 %v206
    %386 = vmatprep.subr.mxu0 %v211
    %387 = vmatpush1.msra.mxu0 %v210
    %388 = vmatprep.subr.mxu0 %v215
    %389 = vmatpush1.msra.mxu0 %v214
    %390 = vmatprep.subr.mxu0 %v219
    %391 = vmatpush1.msra.mxu0 %v218
    %392 = vmatprep.subr.mxu0 %v223
    %393 = vmatpush1.msra.mxu0 %v222
    %394 = vmatprep.subr.mxu0 %v227
    %395 = vmatpush1.msra.mxu0 %v226
    %396 = vmatprep.mubr.f32.mxu0 %v237
    %397 = vmatmul.mubr.f32.gmra.mrb[0].mxu0 %v233
    %v398 = vpop.f32.mrb[0].mxu0
    %v399 = vadd.f32 %v252, %v398
    %v400 = vpop.f32.mrb[0].mxu0
    %v401 = vadd.f32 %v256, %v400
    %402 = vdwg.mxu0
    %v403 = vmax.f32 %v328, 0.0
    %v404 = vmax.f32 %v330, 0.0
    %v405 = vmax.f32 %v399, 0.0
    %v406 = vmax.f32 %v401, 0.0
    %v407 = vld [vmem:[#allocation7] sm:$0xff]
    %v408 = vld [vmem:[#allocation7 + $0x8] sm:$0xff]
    %v409 = vld [vmem:[#allocation7 + $0x10] sm:$0xff]
    %v410 = vld [vmem:[#allocation7 + $0x18] sm:$0xff]
    %v411 = vld [vmem:[#allocation7 + $0x20] sm:$0xff]
    %v412 = vld [vmem:[#allocation7 + $0x28] sm:$0xff]
    %v413 = vld [vmem:[#allocation7 + $0x30] sm:$0xff]
    %v414 = vld [vmem:[#allocation7 + $0x38] sm:$0xff]
    %v415 = vld [vmem:[#allocation7 + $0x40] sm:$0xff]
    %v416 = vld [vmem:[#allocation7 + $0x48] sm:$0xff]
    %v417 = vld [vmem:[#allocation7 + $0x50] sm:$0xff]
    %v418 = vld [vmem:[#allocation7 + $0x58] sm:$0xff]
    %v419 = vld [vmem:[#allocation7 + $0x60] sm:$0xff]
    %v420 = vld [vmem:[#allocation7 + $0x68] sm:$0xff]
    %v421 = vld [vmem:[#allocation7 + $0x70] sm:$0xff]
    %v422 = vld [vmem:[#allocation7 + $0x78] sm:$0xff]
    %v423 = vld [vmem:[#allocation7 + $0x80] sm:$0xff]
    %v424 = vld [vmem:[#allocation7 + $0x88] sm:$0xff]
    %v425 = vld [vmem:[#allocation7 + $0x90] sm:$0xff]
    %v426 = vld [vmem:[#allocation7 + $0x98] sm:$0xff]
    %v427 = vld [vmem:[#allocation7 + $0xa0] sm:$0xff]
    %v428 = vld [vmem:[#allocation7 + $0xa8] sm:$0xff]
    %v429 = vld [vmem:[#allocation7 + $0xb0] sm:$0xff]
    %v430 = vld [vmem:[#allocation7 + $0xb8] sm:$0xff]
    %v431 = vld [vmem:[#allocation7 + $0xc0] sm:$0xff]
    %v432 = vld [vmem:[#allocation7 + $0xc8] sm:$0xff]
    %v433 = vld [vmem:[#allocation7 + $0xd0] sm:$0xff]
    %v434 = vld [vmem:[#allocation7 + $0xd8] sm:$0xff]
    %v435 = vld [vmem:[#allocation7 + $0xe0] sm:$0xff]
    %v436 = vld [vmem:[#allocation7 + $0xe8] sm:$0xff]
    %v437 = vld [vmem:[#allocation7 + $0xf0] sm:$0xff]
    %v438 = vld [vmem:[#allocation7 + $0xf8] sm:$0xff]
    %v439 = vld [vmem:[#allocation7 + $0x100] sm:$0xff]
    %v440 = vld [vmem:[#allocation7 + $0x108] sm:$0xff]
    %v441 = vld [vmem:[#allocation7 + $0x110] sm:$0xff]
    %v442 = vld [vmem:[#allocation7 + $0x118] sm:$0xff]
    %v443 = vld [vmem:[#allocation7 + $0x120] sm:$0xff]
    %v444 = vld [vmem:[#allocation7 + $0x128] sm:$0xff]
    %v445 = vld [vmem:[#allocation7 + $0x130] sm:$0xff]
    %v446 = vld [vmem:[#allocation7 + $0x138] sm:$0xff]
    %v447 = vld [vmem:[#allocation7 + $0x140] sm:$0xff]
    %v448 = vld [vmem:[#allocation7 + $0x148] sm:$0xff]
    %v449 = vld [vmem:[#allocation7 + $0x150] sm:$0xff]
    %v450 = vld [vmem:[#allocation7 + $0x158] sm:$0xff]
    %v451 = vld [vmem:[#allocation7 + $0x160] sm:$0xff]
    %v452 = vld [vmem:[#allocation7 + $0x168] sm:$0xff]
    %v453 = vld [vmem:[#allocation7 + $0x170] sm:$0xff]
    %v454 = vld [vmem:[#allocation7 + $0x178] sm:$0xff]
    %v455 = vld [vmem:[#allocation7 + $0x180] sm:$0xff]
    %v456 = vld [vmem:[#allocation7 + $0x188] sm:$0xff]
    %v457 = vld [vmem:[#allocation7 + $0x190] sm:$0xff]
    %v458 = vld [vmem:[#allocation7 + $0x198] sm:$0xff]
    %v459 = vld [vmem:[#allocation7 + $0x1a0] sm:$0xff]
    %v460 = vld [vmem:[#allocation7 + $0x1a8] sm:$0xff]
    %v461 = vld [vmem:[#allocation7 + $0x1b0] sm:$0xff]
    %v462 = vld [vmem:[#allocation7 + $0x1b8] sm:$0xff]
    %v463 = vld [vmem:[#allocation7 + $0x1c0] sm:$0xff]
    %v464 = vld [vmem:[#allocation7 + $0x1c8] sm:$0xff]
    %v465 = vld [vmem:[#allocation7 + $0x1d0] sm:$0xff]
    %v466 = vld [vmem:[#allocation7 + $0x1d8] sm:$0xff]
    %v467 = vld [vmem:[#allocation7 + $0x1e0] sm:$0xff]
    %v468 = vld [vmem:[#allocation7 + $0x1e8] sm:$0xff]
    %v469 = vld [vmem:[#allocation7 + $0x1f0] sm:$0xff]
    %v470 = vld [vmem:[#allocation7 + $0x1f8] sm:$0xff]
    %v471 = vld [vmem:[#allocation7 + $0x200] sm:$0xff]
    %v472 = vld [vmem:[#allocation7 + $0x208] sm:$0xff]
    %v473 = vld [vmem:[#allocation7 + $0x210] sm:$0xff]
    %v474 = vld [vmem:[#allocation7 + $0x218] sm:$0xff]
    %v475 = vld [vmem:[#allocation7 + $0x220] sm:$0xff]
    %v476 = vld [vmem:[#allocation7 + $0x228] sm:$0xff]
    %v477 = vld [vmem:[#allocation7 + $0x230] sm:$0xff]
    %v478 = vld [vmem:[#allocation7 + $0x238] sm:$0xff]
    %v479 = vld [vmem:[#allocation7 + $0x240] sm:$0xff]
    %v480 = vld [vmem:[#allocation7 + $0x248] sm:$0xff]
    %v481 = vld [vmem:[#allocation7 + $0x250] sm:$0xff]
    %v482 = vld [vmem:[#allocation7 + $0x258] sm:$0xff]
    %v483 = vld [vmem:[#allocation7 + $0x260] sm:$0xff]
    %v484 = vld [vmem:[#allocation7 + $0x268] sm:$0xff]
    %v485 = vld [vmem:[#allocation7 + $0x270] sm:$0xff]
    %v486 = vld [vmem:[#allocation7 + $0x278] sm:$0xff]
    %v487 = vld [vmem:[#allocation7 + $0x280] sm:$0xff]
    %v488 = vld [vmem:[#allocation7 + $0x288] sm:$0xff]
    %v489 = vld [vmem:[#allocation7 + $0x290] sm:$0xff]
    %v490 = vld [vmem:[#allocation7 + $0x298] sm:$0xff]
    %v491 = vld [vmem:[#allocation7 + $0x2a0] sm:$0xff]
    %v492 = vld [vmem:[#allocation7 + $0x2a8] sm:$0xff]
    %v493 = vld [vmem:[#allocation7 + $0x2b0] sm:$0xff]
    %v494 = vld [vmem:[#allocation7 + $0x2b8] sm:$0xff]
    %v495 = vld [vmem:[#allocation7 + $0x2c0] sm:$0xff]
    %v496 = vld [vmem:[#allocation7 + $0x2c8] sm:$0xff]
    %v497 = vld [vmem:[#allocation7 + $0x2d0] sm:$0xff]
    %v498 = vld [vmem:[#allocation7 + $0x2d8] sm:$0xff]
    %v499 = vld [vmem:[#allocation7 + $0x2e0] sm:$0xff]
    %v500 = vld [vmem:[#allocation7 + $0x2e8] sm:$0xff]
    %v501 = vld [vmem:[#allocation7 + $0x2f0] sm:$0xff]
    %v502 = vld [vmem:[#allocation7 + $0x2f8] sm:$0xff]
    %v503 = vld [vmem:[#allocation7 + $0x300] sm:$0xff]
    %v504 = vld [vmem:[#allocation7 + $0x308] sm:$0xff]
    %v505 = vld [vmem:[#allocation7 + $0x310] sm:$0xff]
    %v506 = vld [vmem:[#allocation7 + $0x318] sm:$0xff]
    %v507 = vld [vmem:[#allocation7 + $0x320] sm:$0xff]
    %v508 = vld [vmem:[#allocation7 + $0x328] sm:$0xff]
    %v509 = vld [vmem:[#allocation7 + $0x330] sm:$0xff]
    %v510 = vld [vmem:[#allocation7 + $0x338] sm:$0xff]
    %v511 = vld [vmem:[#allocation7 + $0x340] sm:$0xff]
    %v512 = vld [vmem:[#allocation7 + $0x348] sm:$0xff]
    %v513 = vld [vmem:[#allocation7 + $0x350] sm:$0xff]
    %v514 = vld [vmem:[#allocation7 + $0x358] sm:$0xff]
    %v515 = vld [vmem:[#allocation7 + $0x360] sm:$0xff]
    %v516 = vld [vmem:[#allocation7 + $0x368] sm:$0xff]
    %v517 = vld [vmem:[#allocation7 + $0x370] sm:$0xff]
    %v518 = vld [vmem:[#allocation7 + $0x378] sm:$0xff]
    %v519 = vld [vmem:[#allocation7 + $0x380] sm:$0xff]
    %v520 = vld [vmem:[#allocation7 + $0x388] sm:$0xff]
    %v521 = vld [vmem:[#allocation7 + $0x390] sm:$0xff]
    %v522 = vld [vmem:[#allocation7 + $0x398] sm:$0xff]
    %v523 = vld [vmem:[#allocation7 + $0x3a0] sm:$0xff]
    %v524 = vld [vmem:[#allocation7 + $0x3a8] sm:$0xff]
    %v525 = vld [vmem:[#allocation7 + $0x3b0] sm:$0xff]
    %v526 = vld [vmem:[#allocation7 + $0x3b8] sm:$0xff]
    %v527 = vld [vmem:[#allocation7 + $0x3c0] sm:$0xff]
    %v528 = vld [vmem:[#allocation7 + $0x3c8] sm:$0xff]
    %v529 = vld [vmem:[#allocation7 + $0x3d0] sm:$0xff]
    %v530 = vld [vmem:[#allocation7 + $0x3d8] sm:$0xff]
    %v531 = vld [vmem:[#allocation7 + $0x3e0] sm:$0xff]
    %v532 = vld [vmem:[#allocation7 + $0x3e8] sm:$0xff]
    %v533 = vld [vmem:[#allocation7 + $0x3f0] sm:$0xff]
    %v534 = vld [vmem:[#allocation7 + $0x3f8] sm:$0xff]
    %v535 = vld [vmem:[#allocation7 + $0x400] sm:$0xff]
    %v536 = vld [vmem:[#allocation7 + $0x408] sm:$0xff]
    %v537 = vld [vmem:[#allocation7 + $0x410] sm:$0xff]
    %v538 = vld [vmem:[#allocation7 + $0x418] sm:$0xff]
    %v539 = vld [vmem:[#allocation7 + $0x420] sm:$0xff]
    %v540 = vld [vmem:[#allocation7 + $0x428] sm:$0xff]
    %v541 = vld [vmem:[#allocation7 + $0x430] sm:$0xff]
    %v542 = vld [vmem:[#allocation7 + $0x438] sm:$0xff]
    %v543 = vld [vmem:[#allocation7 + $0x440] sm:$0xff]
    %v544 = vld [vmem:[#allocation7 + $0x448] sm:$0xff]
    %v545 = vld [vmem:[#allocation7 + $0x450] sm:$0xff]
    %v546 = vld [vmem:[#allocation7 + $0x458] sm:$0xff]
    %v547 = vld [vmem:[#allocation7 + $0x460] sm:$0xff]
    %v548 = vld [vmem:[#allocation7 + $0x468] sm:$0xff]
    %v549 = vld [vmem:[#allocation7 + $0x470] sm:$0xff]
    %v550 = vld [vmem:[#allocation7 + $0x478] sm:$0xff]
    %v551 = vld [vmem:[#allocation7 + $0x480] sm:$0xff]
    %v552 = vld [vmem:[#allocation7 + $0x488] sm:$0xff]
    %v553 = vld [vmem:[#allocation7 + $0x490] sm:$0xff]
    %v554 = vld [vmem:[#allocation7 + $0x498] sm:$0xff]
    %v555 = vld [vmem:[#allocation7 + $0x4a0] sm:$0xff]
    %v556 = vld [vmem:[#allocation7 + $0x4a8] sm:$0xff]
    %v557 = vld [vmem:[#allocation7 + $0x4b0] sm:$0xff]
    %v558 = vld [vmem:[#allocation7 + $0x4b8] sm:$0xff]
    %v559 = vld [vmem:[#allocation7 + $0x4c0] sm:$0xff]
    %v560 = vld [vmem:[#allocation7 + $0x4c8] sm:$0xff]
    %v561 = vld [vmem:[#allocation7 + $0x4d0] sm:$0xff]
    %v562 = vld [vmem:[#allocation7 + $0x4d8] sm:$0xff]
    %v563 = vld [vmem:[#allocation7 + $0x4e0] sm:$0xff]
    %v564 = vld [vmem:[#allocation7 + $0x4e8] sm:$0xff]
    %v565 = vld [vmem:[#allocation7 + $0x4f0] sm:$0xff]
    %v566 = vld [vmem:[#allocation7 + $0x4f8] sm:$0xff]
    %v567 = vld [vmem:[#allocation7 + $0x500] sm:$0xff]
    %v568 = vld [vmem:[#allocation7 + $0x508] sm:$0xff]
    %v569 = vld [vmem:[#allocation7 + $0x510] sm:$0xff]
    %v570 = vld [vmem:[#allocation7 + $0x518] sm:$0xff]
    %v571 = vld [vmem:[#allocation7 + $0x520] sm:$0xff]
    %v572 = vld [vmem:[#allocation7 + $0x528] sm:$0xff]
    %v573 = vld [vmem:[#allocation7 + $0x530] sm:$0xff]
    %v574 = vld [vmem:[#allocation7 + $0x538] sm:$0xff]
    %v575 = vld [vmem:[#allocation7 + $0x540] sm:$0xff]
    %v576 = vld [vmem:[#allocation7 + $0x548] sm:$0xff]
    %v577 = vld [vmem:[#allocation7 + $0x550] sm:$0xff]
    %v578 = vld [vmem:[#allocation7 + $0x558] sm:$0xff]
    %v579 = vld [vmem:[#allocation7 + $0x560] sm:$0xff]
    %v580 = vld [vmem:[#allocation7 + $0x568] sm:$0xff]
    %v581 = vld [vmem:[#allocation7 + $0x570] sm:$0xff]
    %v582 = vld [vmem:[#allocation7 + $0x578] sm:$0xff]
    %v583 = vld [vmem:[#allocation7 + $0x580] sm:$0xff]
    %v584 = vld [vmem:[#allocation7 + $0x588] sm:$0xff]
    %v585 = vld [vmem:[#allocation7 + $0x590] sm:$0xff]
    %v586 = vld [vmem:[#allocation7 + $0x598] sm:$0xff]
    %v587 = vld [vmem:[#allocation7 + $0x5a0] sm:$0xff]
    %v588 = vld [vmem:[#allocation7 + $0x5a8] sm:$0xff]
    %v589 = vld [vmem:[#allocation7 + $0x5b0] sm:$0xff]
    %v590 = vld [vmem:[#allocation7 + $0x5b8] sm:$0xff]
    %v591 = vld [vmem:[#allocation7 + $0x5c0] sm:$0xff]
    %v592 = vld [vmem:[#allocation7 + $0x5c8] sm:$0xff]
    %v593 = vld [vmem:[#allocation7 + $0x5d0] sm:$0xff]
    %v594 = vld [vmem:[#allocation7 + $0x5d8] sm:$0xff]
    %v595 = vld [vmem:[#allocation7 + $0x5e0] sm:$0xff]
    %v596 = vld [vmem:[#allocation7 + $0x5e8] sm:$0xff]
    %v597 = vld [vmem:[#allocation7 + $0x5f0] sm:$0xff]
    %v598 = vld [vmem:[#allocation7 + $0x5f8] sm:$0xff]
    %v599 = vld [vmem:[%s4] sm:$0x7]
    %v601 = vlaneseq
    %v602 = vshrl.u32 %v601, 7
    %v603 = vsub.s32 0, %v602
    %v604 = vrot.slane %v599, %v603
    %v605 = vlaneseq
    %v606 = vshrl.u32 %v605, 7
    %v607 = vsub.s32 1, %v606
    %v608 = vrot.slane %v599, %v607
    %v609 = vlaneseq
    %v610 = vshrl.u32 %v609, 7
    %v611 = vsub.s32 2, %v610
    %v612 = vrot.slane %v599, %v611
    %616 = vmatprep.subr.mxu0 %v408
    %617 = vmatpush1.msra.mxu0 %v407
    %618 = vmatprep.subr.mxu0 %v411
    %619 = vmatpush1.msra.mxu0 %v410
    %620 = vmatprep.subr.mxu0 %v414
    %621 = vmatpush1.msra.mxu0 %v413
    %622 = vmatprep.subr.mxu0 %v417
    %623 = vmatpush1.msra.mxu0 %v416
    %624 = vmatprep.subr.mxu0 %v420
    %625 = vmatpush1.msra.mxu0 %v419
    %626 = vmatprep.subr.mxu0 %v423
    %627 = vmatpush1.msra.mxu0 %v422
    %628 = vmatprep.subr.mxu0 %v426
    %629 = vmatpush1.msra.mxu0 %v425
    %630 = vmatprep.subr.mxu0 %v429
    %631 = vmatpush1.msra.mxu0 %v428
    %632 = vmatprep.subr.mxu0 %v432
    %633 = vmatpush1.msra.mxu0 %v431
    %634 = vmatprep.subr.mxu0 %v435
    %635 = vmatpush1.msra.mxu0 %v434
    %636 = vmatprep.subr.mxu0 %v438
    %637 = vmatpush1.msra.mxu0 %v437
    %638 = vmatprep.subr.mxu0 %v441
    %639 = vmatpush1.msra.mxu0 %v440
    %640 = vmatprep.subr.mxu0 %v444
    %641 = vmatpush1.msra.mxu0 %v443
    %642 = vmatprep.subr.mxu0 %v447
    %643 = vmatpush1.msra.mxu0 %v446
    %644 = vmatprep.subr.mxu0 %v450
    %645 = vmatpush1.msra.mxu0 %v449
    %646 = vmatprep.subr.mxu0 %v453
    %647 = vmatpush1.msra.mxu0 %v452
    %648 = vmatprep.subr.mxu0 %v456
    %649 = vmatpush1.msra.mxu0 %v455
    %650 = vmatprep.subr.mxu0 %v459
    %651 = vmatpush1.msra.mxu0 %v458
    %652 = vmatprep.subr.mxu0 %v462
    %653 = vmatpush1.msra.mxu0 %v461
    %654 = vmatprep.subr.mxu0 %v465
    %655 = vmatpush1.msra.mxu0 %v464
    %656 = vmatprep.subr.mxu0 %v468
    %657 = vmatpush1.msra.mxu0 %v467
    %658 = vmatprep.subr.mxu0 %v471
    %659 = vmatpush1.msra.mxu0 %v470
    %660 = vmatprep.subr.mxu0 %v474
    %661 = vmatpush1.msra.mxu0 %v473
    %662 = vmatprep.subr.mxu0 %v477
    %663 = vmatpush1.msra.mxu0 %v476
    %664 = vmatprep.subr.mxu0 %v480
    %665 = vmatpush1.msra.mxu0 %v479
    %666 = vmatprep.subr.mxu0 %v483
    %667 = vmatpush1.msra.mxu0 %v482
    %668 = vmatprep.subr.mxu0 %v486
    %669 = vmatpush1.msra.mxu0 %v485
    %670 = vmatprep.subr.mxu0 %v489
    %671 = vmatpush1.msra.mxu0 %v488
    %672 = vmatprep.subr.mxu0 %v492
    %673 = vmatpush1.msra.mxu0 %v491
    %674 = vmatprep.subr.mxu0 %v495
    %675 = vmatpush1.msra.mxu0 %v494
    %676 = vmatprep.subr.mxu0 %v498
    %677 = vmatpush1.msra.mxu0 %v497
    %678 = vmatprep.subr.mxu0 %v501
    %679 = vmatpush1.msra.mxu0 %v500
    %680 = vmatprep.mubr.f32.mxu0 %v404
    %681 = vmatmul.mubr.f32.gmra.mrb[0].mxu0 %v403
    %v682 = vpop.f32.mrb[0].mxu0
    %v683 = vadd.f32 %v604, %v682
    %v684 = vpop.f32.mrb[0].mxu0
    %v685 = vadd.f32 %v608, %v684
    %686 = vdwg.mxu0
    %687 = vmatprep.subr.mxu0 %v504
    %688 = vmatpush1.msra.mxu0 %v503
    %689 = vmatprep.subr.mxu0 %v507
    %690 = vmatpush1.msra.mxu0 %v506
    %691 = vmatprep.subr.mxu0 %v510
    %692 = vmatpush1.msra.mxu0 %v509
    %693 = vmatprep.subr.mxu0 %v513
    %694 = vmatpush1.msra.mxu0 %v512
    %695 = vmatprep.subr.mxu0 %v516
    %696 = vmatpush1.msra.mxu0 %v515
    %697 = vmatprep.subr.mxu0 %v519
    %698 = vmatpush1.msra.mxu0 %v518
    %699 = vmatprep.subr.mxu0 %v522
    %700 = vmatpush1.msra.mxu0 %v521
    %701 = vmatprep.subr.mxu0 %v525
    %702 = vmatpush1.msra.mxu0 %v524
    %703 = vmatprep.subr.mxu0 %v528
    %704 = vmatpush1.msra.mxu0 %v527
    %705 = vmatprep.subr.mxu0 %v531
    %706 = vmatpush1.msra.mxu0 %v530
    %707 = vmatprep.subr.mxu0 %v534
    %708 = vmatpush1.msra.mxu0 %v533
    %709 = vmatprep.subr.mxu0 %v537
    %710 = vmatpush1.msra.mxu0 %v536
    %711 = vmatprep.subr.mxu0 %v540
    %712 = vmatpush1.msra.mxu0 %v539
    %713 = vmatprep.subr.mxu0 %v543
    %714 = vmatpush1.msra.mxu0 %v542
    %715 = vmatprep.subr.mxu0 %v546
    %716 = vmatpush1.msra.mxu0 %v545
    %717 = vmatprep.subr.mxu0 %v549
    %718 = vmatpush1.msra.mxu0 %v548
    %719 = vmatprep.subr.mxu0 %v552
    %720 = vmatpush1.msra.mxu0 %v551
    %721 = vmatprep.subr.mxu0 %v555
    %722 = vmatpush1.msra.mxu0 %v554
    %723 = vmatprep.subr.mxu0 %v558
    %724 = vmatpush1.msra.mxu0 %v557
    %725 = vmatprep.subr.mxu0 %v561
    %726 = vmatpush1.msra.mxu0 %v560
    %727 = vmatprep.subr.mxu0 %v564
    %728 = vmatpush1.msra.mxu0 %v563
    %729 = vmatprep.subr.mxu0 %v567
    %730 = vmatpush1.msra.mxu0 %v566
    %731 = vmatprep.subr.mxu0 %v570
    %732 = vmatpush1.msra.mxu0 %v569
    %733 = vmatprep.subr.mxu0 %v573
    %734 = vmatpush1.msra.mxu0 %v572
    %735 = vmatprep.subr.mxu0 %v576
    %736 = vmatpush1.msra.mxu0 %v575
    %737 = vmatprep.subr.mxu0 %v579
    %738 = vmatpush1.msra.mxu0 %v578
    %739 = vmatprep.subr.mxu0 %v582
    %740 = vmatpush1.msra.mxu0 %v581
    %741 = vmatprep.subr.mxu0 %v585
    %742 = vmatpush1.msra.mxu0 %v584
    %743 = vmatprep.subr.mxu0 %v588
    %744 = vmatpush1.msra.mxu0 %v587
    %745 = vmatprep.subr.mxu0 %v591
    %746 = vmatpush1.msra.mxu0 %v590
    %747 = vmatprep.subr.mxu0 %v594
    %748 = vmatpush1.msra.mxu0 %v593
    %749 = vmatprep.subr.mxu0 %v597
    %750 = vmatpush1.msra.mxu0 %v596
    %751 = vmatprep.mubr.f32.mxu0 %v406
    %752 = vmatmul.mubr.f32.gmra.mrb[0].mxu0 %v405
    %v753 = vpop.f32.mrb[0].mxu0
    %v754 = vadd.f32 %v683, %v753
    %v755 = vpop.f32.mrb[0].mxu0
    %v756 = vadd.f32 %v685, %v755
    %757 = vdwg.mxu0
    %758 = vmatprep.subr.mxu0 0.0
    %759 = vmatpush1.msra.mxu0 %v409
    %760 = vmatprep.subr.mxu0 0.0
    %761 = vmatpush1.msra.mxu0 %v412
    %762 = vmatprep.subr.mxu0 0.0
    %763 = vmatpush1.msra.mxu0 %v415
    %764 = vmatprep.subr.mxu0 0.0
    %765 = vmatpush1.msra.mxu0 %v418
    %766 = vmatprep.subr.mxu0 0.0
    %767 = vmatpush1.msra.mxu0 %v421
    %768 = vmatprep.subr.mxu0 0.0
    %769 = vmatpush1.msra.mxu0 %v424
    %770 = vmatprep.subr.mxu0 0.0
    %771 = vmatpush1.msra.mxu0 %v427
    %772 = vmatprep.subr.mxu0 0.0
    %773 = vmatpush1.msra.mxu0 %v430
    %774 = vmatprep.subr.mxu0 0.0
    %775 = vmatpush1.msra.mxu0 %v433
    %776 = vmatprep.subr.mxu0 0.0
    %777 = vmatpush1.msra.mxu0 %v436
    %778 = vmatprep.subr.mxu0 0.0
    %779 = vmatpush1.msra.mxu0 %v439
    %780 = vmatprep.subr.mxu0 0.0
    %781 = vmatpush1.msra.mxu0 %v442
    %782 = vmatprep.subr.mxu0 0.0
    %783 = vmatpush1.msra.mxu0 %v445
    %784 = vmatprep.subr.mxu0 0.0
    %785 = vmatpush1.msra.mxu0 %v448
    %786 = vmatprep.subr.mxu0 0.0
    %787 = vmatpush1.msra.mxu0 %v451
    %788 = vmatprep.subr.mxu0 0.0
    %789 = vmatpush1.msra.mxu0 %v454
    %790 = vmatprep.subr.mxu0 0.0
    %791 = vmatpush1.msra.mxu0 %v457
    %792 = vmatprep.subr.mxu0 0.0
    %793 = vmatpush1.msra.mxu0 %v460
    %794 = vmatprep.subr.mxu0 0.0
    %795 = vmatpush1.msra.mxu0 %v463
    %796 = vmatprep.subr.mxu0 0.0
    %797 = vmatpush1.msra.mxu0 %v466
    %798 = vmatprep.subr.mxu0 0.0
    %799 = vmatpush1.msra.mxu0 %v469
    %800 = vmatprep.subr.mxu0 0.0
    %801 = vmatpush1.msra.mxu0 %v472
    %802 = vmatprep.subr.mxu0 0.0
    %803 = vmatpush1.msra.mxu0 %v475
    %804 = vmatprep.subr.mxu0 0.0
    %805 = vmatpush1.msra.mxu0 %v478
    %806 = vmatprep.subr.mxu0 0.0
    %807 = vmatpush1.msra.mxu0 %v481
    %808 = vmatprep.subr.mxu0 0.0
    %809 = vmatpush1.msra.mxu0 %v484
    %810 = vmatprep.subr.mxu0 0.0
    %811 = vmatpush1.msra.mxu0 %v487
    %812 = vmatprep.subr.mxu0 0.0
    %813 = vmatpush1.msra.mxu0 %v490
    %814 = vmatprep.subr.mxu0 0.0
    %815 = vmatpush1.msra.mxu0 %v493
    %816 = vmatprep.subr.mxu0 0.0
    %817 = vmatpush1.msra.mxu0 %v496
    %818 = vmatprep.subr.mxu0 0.0
    %819 = vmatpush1.msra.mxu0 %v499
    %820 = vmatprep.subr.mxu0 0.0
    %821 = vmatpush1.msra.mxu0 %v502
    %822 = vmatprep.mubr.f32.mxu0 %v404
    %823 = vmatmul.mubr.f32.gmra.mrb[0].mxu0 %v403
    %v824 = vpop.f32.mrb[0].mxu0
    %v825 = vadd.f32 %v612, %v824
    %v826 = vpop.f32.mrb[0].mxu0
    %827 = vdwg.mxu0
    %828 = vmatprep.subr.mxu0 0.0
    %829 = vmatpush1.msra.mxu0 %v505
    %830 = vmatprep.subr.mxu0 0.0
    %831 = vmatpush1.msra.mxu0 %v508
    %832 = vmatprep.subr.mxu0 0.0
    %833 = vmatpush1.msra.mxu0 %v511
    %834 = vmatprep.subr.mxu0 0.0
    %835 = vmatpush1.msra.mxu0 %v514
    %836 = vmatprep.subr.mxu0 0.0
    %837 = vmatpush1.msra.mxu0 %v517
    %838 = vmatprep.subr.mxu0 0.0
    %839 = vmatpush1.msra.mxu0 %v520
    %840 = vmatprep.subr.mxu0 0.0
    %841 = vmatpush1.msra.mxu0 %v523
    %842 = vmatprep.subr.mxu0 0.0
    %843 = vmatpush1.msra.mxu0 %v526
    %844 = vmatprep.subr.mxu0 0.0
    %845 = vmatpush1.msra.mxu0 %v529
    %846 = vmatprep.subr.mxu0 0.0
    %847 = vmatpush1.msra.mxu0 %v532
    %848 = vmatprep.subr.mxu0 0.0
    %849 = vmatpush1.msra.mxu0 %v535
    %850 = vmatprep.subr.mxu0 0.0
    %851 = vmatpush1.msra.mxu0 %v538
    %852 = vmatprep.subr.mxu0 0.0
    %853 = vmatpush1.msra.mxu0 %v541
    %854 = vmatprep.subr.mxu0 0.0
    %855 = vmatpush1.msra.mxu0 %v544
    %856 = vmatprep.subr.mxu0 0.0
    %857 = vmatpush1.msra.mxu0 %v547
    %858 = vmatprep.subr.mxu0 0.0
    %859 = vmatpush1.msra.mxu0 %v550
    %860 = vmatprep.subr.mxu0 0.0
    %861 = vmatpush1.msra.mxu0 %v553
    %862 = vmatprep.subr.mxu0 0.0
    %863 = vmatpush1.msra.mxu0 %v556
    %864 = vmatprep.subr.mxu0 0.0
    %865 = vmatpush1.msra.mxu0 %v559
    %866 = vmatprep.subr.mxu0 0.0
    %867 = vmatpush1.msra.mxu0 %v562
    %868 = vmatprep.subr.mxu0 0.0
    %869 = vmatpush1.msra.mxu0 %v565
    %870 = vmatprep.subr.mxu0 0.0
    %871 = vmatpush1.msra.mxu0 %v568
    %872 = vmatprep.subr.mxu0 0.0
    %873 = vmatpush1.msra.mxu0 %v571
    %874 = vmatprep.subr.mxu0 0.0
    %875 = vmatpush1.msra.mxu0 %v574
    %876 = vmatprep.subr.mxu0 0.0
    %877 = vmatpush1.msra.mxu0 %v577
    %878 = vmatprep.subr.mxu0 0.0
    %879 = vmatpush1.msra.mxu0 %v580
    %880 = vmatprep.subr.mxu0 0.0
    %881 = vmatpush1.msra.mxu0 %v583
    %882 = vmatprep.subr.mxu0 0.0
    %883 = vmatpush1.msra.mxu0 %v586
    %884 = vmatprep.subr.mxu0 0.0
    %885 = vmatpush1.msra.mxu0 %v589
    %886 = vmatprep.subr.mxu0 0.0
    %887 = vmatpush1.msra.mxu0 %v592
    %888 = vmatprep.subr.mxu0 0.0
    %889 = vmatpush1.msra.mxu0 %v595
    %890 = vmatprep.subr.mxu0 0.0
    %891 = vmatpush1.msra.mxu0 %v598
    %892 = vmatprep.mubr.f32.mxu0 %v406
    %893 = vmatmul.mubr.f32.gmra.mrb[0].mxu0 %v405
    %v894 = vpop.f32.mrb[0].mxu0
    %v895 = vadd.f32 %v825, %v894
    %v896 = vpop.f32.mrb[0].mxu0
    %897 = vdwg.mxu0
    %v898 = vmax.f32 %v754, 0.0
    %v899 = vmax.f32 %v756, 0.0
    %v900 = vmax.f32 %v895, 0.0
    %v901 = vld [vmem:[#allocation8] sm:$0xff]
    %v902 = vld [vmem:[#allocation8 + $0x8] sm:$0xff]
    %v903 = vld [vmem:[#allocation8 + $0x10] sm:$0xff]
    %v904 = vld [vmem:[#allocation8 + $0x18] sm:$0xff]
    %v905 = vld [vmem:[#allocation8 + $0x20] sm:$0xff]
    %v906 = vld [vmem:[#allocation8 + $0x28] sm:$0xff]
    %v907 = vld [vmem:[#allocation8 + $0x30] sm:$0xff]
    %v908 = vld [vmem:[#allocation8 + $0x38] sm:$0xff]
    %v909 = vld [vmem:[#allocation8 + $0x40] sm:$0xff]
    %v910 = vld [vmem:[#allocation8 + $0x48] sm:$0xff]
    %v911 = vld [vmem:[#allocation8 + $0x50] sm:$0xff]
    %v912 = vld [vmem:[#allocation8 + $0x58] sm:$0xff]
    %v913 = vld [vmem:[#allocation8 + $0x60] sm:$0xff]
    %v914 = vld [vmem:[#allocation8 + $0x68] sm:$0xff]
    %v915 = vld [vmem:[#allocation8 + $0x70] sm:$0xff]
    %v916 = vld [vmem:[#allocation8 + $0x78] sm:$0xff]
    %v917 = vld [vmem:[#allocation8 + $0x80] sm:$0xff]
    %v918 = vld [vmem:[#allocation8 + $0x88] sm:$0xff]
    %v919 = vld [vmem:[#allocation8 + $0x90] sm:$0xff]
    %v920 = vld [vmem:[#allocation8 + $0x98] sm:$0xff]
    %v921 = vld [vmem:[#allocation8 + $0xa0] sm:$0xff]
    %v922 = vld [vmem:[#allocation8 + $0xa8] sm:$0xff]
    %v923 = vld [vmem:[#allocation8 + $0xb0] sm:$0xff]
    %v924 = vld [vmem:[#allocation8 + $0xb8] sm:$0xff]
    %v925 = vld [vmem:[#allocation8 + $0xc0] sm:$0xff]
    %v926 = vld [vmem:[#allocation8 + $0xc8] sm:$0xff]
    %v927 = vld [vmem:[#allocation8 + $0xd0] sm:$0xff]
    %v928 = vld [vmem:[#allocation8 + $0xd8] sm:$0xff]
    %v929 = vld [vmem:[#allocation8 + $0xe0] sm:$0xff]
    %v930 = vld [vmem:[#allocation8 + $0xe8] sm:$0xff]
    %v931 = vld [vmem:[#allocation8 + $0xf0] sm:$0xff]
    %v932 = vld [vmem:[#allocation8 + $0xf8] sm:$0xff]
    %v933 = vld [vmem:[#allocation8 + $0x100] sm:$0xff]
    %v934 = vld [vmem:[#allocation8 + $0x108] sm:$0xff]
    %v935 = vld [vmem:[#allocation8 + $0x110] sm:$0xff]
    %v936 = vld [vmem:[#allocation8 + $0x118] sm:$0xff]
    %v937 = vld [vmem:[#allocation8 + $0x120] sm:$0xff]
    %v938 = vld [vmem:[#allocation8 + $0x128] sm:$0xff]
    %v939 = vld [vmem:[#allocation8 + $0x130] sm:$0xff]
    %v940 = vld [vmem:[#allocation8 + $0x138] sm:$0xff]
    %v941 = vld [vmem:[#allocation8 + $0x140] sm:$0xff]
    %v942 = vld [vmem:[#allocation8 + $0x148] sm:$0xff]
    %v943 = vld [vmem:[#allocation8 + $0x150] sm:$0xff]
    %v944 = vld [vmem:[#allocation8 + $0x158] sm:$0xff]
    %v945 = vld [vmem:[#allocation8 + $0x160] sm:$0xff]
    %v946 = vld [vmem:[#allocation8 + $0x168] sm:$0xff]
    %v947 = vld [vmem:[#allocation8 + $0x170] sm:$0xff]
    %v948 = vld [vmem:[#allocation8 + $0x178] sm:$0xff]
    %v949 = vld [vmem:[#allocation8 + $0x180] sm:$0xff]
    %v950 = vld [vmem:[#allocation8 + $0x188] sm:$0xff]
    %v951 = vld [vmem:[#allocation8 + $0x190] sm:$0xff]
    %v952 = vld [vmem:[#allocation8 + $0x198] sm:$0xff]
    %v953 = vld [vmem:[#allocation8 + $0x1a0] sm:$0xff]
    %v954 = vld [vmem:[#allocation8 + $0x1a8] sm:$0xff]
    %v955 = vld [vmem:[#allocation8 + $0x1b0] sm:$0xff]
    %v956 = vld [vmem:[#allocation8 + $0x1b8] sm:$0xff]
    %v957 = vld [vmem:[#allocation8 + $0x1c0] sm:$0xff]
    %v958 = vld [vmem:[#allocation8 + $0x1c8] sm:$0xff]
    %v959 = vld [vmem:[#allocation8 + $0x1d0] sm:$0xff]
    %v960 = vld [vmem:[#allocation8 + $0x1d8] sm:$0xff]
    %v961 = vld [vmem:[#allocation8 + $0x1e0] sm:$0xff]
    %v962 = vld [vmem:[#allocation8 + $0x1e8] sm:$0xff]
    %v963 = vld [vmem:[#allocation8 + $0x1f0] sm:$0xff]
    %v964 = vld [vmem:[#allocation8 + $0x1f8] sm:$0xff]
    %v965 = vld [vmem:[#allocation8 + $0x200] sm:$0xff]
    %v966 = vld [vmem:[#allocation8 + $0x208] sm:$0xff]
    %v967 = vld [vmem:[#allocation8 + $0x210] sm:$0xff]
    %v968 = vld [vmem:[#allocation8 + $0x218] sm:$0xff]
    %v969 = vld [vmem:[#allocation8 + $0x220] sm:$0xff]
    %v970 = vld [vmem:[#allocation8 + $0x228] sm:$0xff]
    %v971 = vld [vmem:[#allocation8 + $0x230] sm:$0xff]
    %v972 = vld [vmem:[#allocation8 + $0x238] sm:$0xff]
    %v973 = vld [vmem:[#allocation8 + $0x240] sm:$0xff]
    %v974 = vld [vmem:[#allocation8 + $0x248] sm:$0xff]
    %v975 = vld [vmem:[#allocation8 + $0x250] sm:$0xff]
    %v976 = vld [vmem:[#allocation8 + $0x258] sm:$0xff]
    %v977 = vld [vmem:[#allocation8 + $0x260] sm:$0xff]
    %v978 = vld [vmem:[#allocation8 + $0x268] sm:$0xff]
    %v979 = vld [vmem:[#allocation8 + $0x270] sm:$0xff]
    %v980 = vld [vmem:[#allocation8 + $0x278] sm:$0xff]
    %v981 = vld [vmem:[#allocation8 + $0x280] sm:$0xff]
    %v982 = vld [vmem:[#allocation8 + $0x288] sm:$0xff]
    %v983 = vld [vmem:[#allocation8 + $0x290] sm:$0xff]
    %v984 = vld [vmem:[#allocation8 + $0x298] sm:$0xff]
    %v985 = vld [vmem:[#allocation8 + $0x2a0] sm:$0xff]
    %v986 = vld [vmem:[#allocation8 + $0x2a8] sm:$0xff]
    %v987 = vld [vmem:[#allocation8 + $0x2b0] sm:$0xff]
    %v988 = vld [vmem:[#allocation8 + $0x2b8] sm:$0xff]
    %v989 = vld [vmem:[#allocation8 + $0x2c0] sm:$0xff]
    %v990 = vld [vmem:[#allocation8 + $0x2c8] sm:$0xff]
    %v991 = vld [vmem:[#allocation8 + $0x2d0] sm:$0xff]
    %v992 = vld [vmem:[#allocation8 + $0x2d8] sm:$0xff]
    %v993 = vld [vmem:[#allocation8 + $0x2e0] sm:$0xff]
    %v994 = vld [vmem:[#allocation8 + $0x2e8] sm:$0xff]
    %v995 = vld [vmem:[#allocation8 + $0x2f0] sm:$0xff]
    %v996 = vld [vmem:[#allocation8 + $0x2f8] sm:$0xff]
    %v997 = vld [vmem:[#allocation8 + $0x300] sm:$0xff]
    %v998 = vld [vmem:[#allocation8 + $0x308] sm:$0xff]
    %v999 = vld [vmem:[#allocation8 + $0x310] sm:$0xff]
    %v1000 = vld [vmem:[#allocation8 + $0x318] sm:$0xff]
    %v1001 = vld [vmem:[#allocation8 + $0x320] sm:$0xff]
    %v1002 = vld [vmem:[#allocation8 + $0x328] sm:$0xff]
    %v1003 = vld [vmem:[#allocation8 + $0x330] sm:$0xff]
    %v1004 = vld [vmem:[#allocation8 + $0x338] sm:$0xff]
    %v1005 = vld [vmem:[#allocation8 + $0x340] sm:$0xff]
    %v1006 = vld [vmem:[#allocation8 + $0x348] sm:$0xff]
    %v1007 = vld [vmem:[#allocation8 + $0x350] sm:$0xff]
    %v1008 = vld [vmem:[#allocation8 + $0x358] sm:$0xff]
    %v1009 = vld [vmem:[#allocation8 + $0x360] sm:$0xff]
    %v1010 = vld [vmem:[#allocation8 + $0x368] sm:$0xff]
    %v1011 = vld [vmem:[#allocation8 + $0x370] sm:$0xff]
    %v1012 = vld [vmem:[#allocation8 + $0x378] sm:$0xff]
    %v1013 = vld [vmem:[#allocation8 + $0x380] sm:$0xff]
    %v1014 = vld [vmem:[#allocation8 + $0x388] sm:$0xff]
    %v1015 = vld [vmem:[#allocation8 + $0x390] sm:$0xff]
    %v1016 = vld [vmem:[#allocation8 + $0x398] sm:$0xff]
    %v1017 = vld [vmem:[#allocation8 + $0x3a0] sm:$0xff]
    %v1018 = vld [vmem:[#allocation8 + $0x3a8] sm:$0xff]
    %v1019 = vld [vmem:[#allocation8 + $0x3b0] sm:$0xff]
    %v1020 = vld [vmem:[#allocation8 + $0x3b8] sm:$0xff]
    %v1021 = vld [vmem:[#allocation8 + $0x3c0] sm:$0xff]
    %v1022 = vld [vmem:[#allocation8 + $0x3c8] sm:$0xff]
    %v1023 = vld [vmem:[#allocation8 + $0x3d0] sm:$0xff]
    %v1024 = vld [vmem:[#allocation8 + $0x3d8] sm:$0xff]
    %v1025 = vld [vmem:[#allocation8 + $0x3e0] sm:$0xff]
    %v1026 = vld [vmem:[#allocation8 + $0x3e8] sm:$0xff]
    %v1027 = vld [vmem:[#allocation8 + $0x3f0] sm:$0xff]
    %v1028 = vld [vmem:[#allocation8 + $0x3f8] sm:$0xff]
    %v1029 = vld [vmem:[#allocation8 + $0x400] sm:$0xff]
    %v1030 = vld [vmem:[#allocation8 + $0x408] sm:$0xff]
    %v1031 = vld [vmem:[#allocation8 + $0x410] sm:$0xff]
    %v1032 = vld [vmem:[#allocation8 + $0x418] sm:$0xff]
    %v1033 = vld [vmem:[#allocation8 + $0x420] sm:$0xff]
    %v1034 = vld [vmem:[#allocation8 + $0x428] sm:$0xff]
    %v1035 = vld [vmem:[#allocation8 + $0x430] sm:$0xff]
    %v1036 = vld [vmem:[#allocation8 + $0x438] sm:$0xff]
    %v1037 = vld [vmem:[#allocation8 + $0x440] sm:$0xff]
    %v1038 = vld [vmem:[#allocation8 + $0x448] sm:$0xff]
    %v1039 = vld [vmem:[#allocation8 + $0x450] sm:$0xff]
    %v1040 = vld [vmem:[#allocation8 + $0x458] sm:$0xff]
    %v1041 = vld [vmem:[#allocation8 + $0x460] sm:$0xff]
    %v1042 = vld [vmem:[#allocation8 + $0x468] sm:$0xff]
    %v1043 = vld [vmem:[#allocation8 + $0x470] sm:$0xff]
    %v1044 = vld [vmem:[#allocation8 + $0x478] sm:$0xff]
    %v1045 = vld [vmem:[#allocation8 + $0x480] sm:$0xff]
    %v1046 = vld [vmem:[#allocation8 + $0x488] sm:$0xff]
    %v1047 = vld [vmem:[#allocation8 + $0x490] sm:$0xff]
    %v1048 = vld [vmem:[#allocation8 + $0x498] sm:$0xff]
    %v1049 = vld [vmem:[#allocation8 + $0x4a0] sm:$0xff]
    %v1050 = vld [vmem:[#allocation8 + $0x4a8] sm:$0xff]
    %v1051 = vld [vmem:[#allocation8 + $0x4b0] sm:$0xff]
    %v1052 = vld [vmem:[#allocation8 + $0x4b8] sm:$0xff]
    %v1053 = vld [vmem:[#allocation8 + $0x4c0] sm:$0xff]
    %v1054 = vld [vmem:[#allocation8 + $0x4c8] sm:$0xff]
    %v1055 = vld [vmem:[#allocation8 + $0x4d0] sm:$0xff]
    %v1056 = vld [vmem:[#allocation8 + $0x4d8] sm:$0xff]
    %v1057 = vld [vmem:[#allocation8 + $0x4e0] sm:$0xff]
    %v1058 = vld [vmem:[#allocation8 + $0x4e8] sm:$0xff]
    %v1059 = vld [vmem:[#allocation8 + $0x4f0] sm:$0xff]
    %v1060 = vld [vmem:[#allocation8 + $0x4f8] sm:$0xff]
    %v1061 = vld [vmem:[#allocation8 + $0x500] sm:$0xff]
    %v1062 = vld [vmem:[#allocation8 + $0x508] sm:$0xff]
    %v1063 = vld [vmem:[#allocation8 + $0x510] sm:$0xff]
    %v1064 = vld [vmem:[#allocation8 + $0x518] sm:$0xff]
    %v1065 = vld [vmem:[#allocation8 + $0x520] sm:$0xff]
    %v1066 = vld [vmem:[#allocation8 + $0x528] sm:$0xff]
    %v1067 = vld [vmem:[#allocation8 + $0x530] sm:$0xff]
    %v1068 = vld [vmem:[#allocation8 + $0x538] sm:$0xff]
    %v1069 = vld [vmem:[#allocation8 + $0x540] sm:$0xff]
    %v1070 = vld [vmem:[#allocation8 + $0x548] sm:$0xff]
    %v1071 = vld [vmem:[#allocation8 + $0x550] sm:$0xff]
    %v1072 = vld [vmem:[#allocation8 + $0x558] sm:$0xff]
    %v1073 = vld [vmem:[#allocation8 + $0x560] sm:$0xff]
    %v1074 = vld [vmem:[#allocation8 + $0x568] sm:$0xff]
    %v1075 = vld [vmem:[#allocation8 + $0x570] sm:$0xff]
    %v1076 = vld [vmem:[#allocation8 + $0x578] sm:$0xff]
    %v1077 = vld [vmem:[#allocation8 + $0x580] sm:$0xff]
    %v1078 = vld [vmem:[#allocation8 + $0x588] sm:$0xff]
    %v1079 = vld [vmem:[#allocation8 + $0x590] sm:$0xff]
    %v1080 = vld [vmem:[#allocation8 + $0x598] sm:$0xff]
    %v1081 = vld [vmem:[#allocation8 + $0x5a0] sm:$0xff]
    %v1082 = vld [vmem:[#allocation8 + $0x5a8] sm:$0xff]
    %v1083 = vld [vmem:[#allocation8 + $0x5b0] sm:$0xff]
    %v1084 = vld [vmem:[#allocation8 + $0x5b8] sm:$0xff]
    %v1085 = vld [vmem:[#allocation8 + $0x5c0] sm:$0xff]
    %v1086 = vld [vmem:[#allocation8 + $0x5c8] sm:$0xff]
    %v1087 = vld [vmem:[#allocation8 + $0x5d0] sm:$0xff]
    %v1088 = vld [vmem:[#allocation8 + $0x5d8] sm:$0xff]
    %v1089 = vld [vmem:[#allocation8 + $0x5e0] sm:$0xff]
    %v1090 = vld [vmem:[#allocation8 + $0x5e8] sm:$0xff]
    %v1091 = vld [vmem:[#allocation8 + $0x5f0] sm:$0xff]
    %v1092 = vld [vmem:[#allocation8 + $0x5f8] sm:$0xff]
    %v1093 = vld [vmem:[%s6] sm:$0xf]
    %v1095 = vlaneseq
    %v1096 = vshrl.u32 %v1095, 7
    %v1097 = vsub.s32 0, %v1096
    %v1098 = vrot.slane %v1093, %v1097
    %v1099 = vlaneseq
    %v1100 = vshrl.u32 %v1099, 7
    %v1101 = vsub.s32 1, %v1100
    %v1102 = vrot.slane %v1093, %v1101
    %v1103 = vlaneseq
    %v1104 = vshrl.u32 %v1103, 7
    %v1105 = vsub.s32 2, %v1104
    %v1106 = vrot.slane %v1093, %v1105
    %v1107 = vlaneseq
    %v1108 = vshrl.u32 %v1107, 7
    %v1109 = vsub.s32 3, %v1108
    %v1110 = vrot.slane %v1093, %v1109
    %1115 = vmatprep.subr.mxu0 %v902
    %1116 = vmatpush1.msra.mxu0 %v901
    %1117 = vmatprep.subr.mxu0 %v906
    %1118 = vmatpush1.msra.mxu0 %v905
    %1119 = vmatprep.subr.mxu0 %v910
    %1120 = vmatpush1.msra.mxu0 %v909
    %1121 = vmatprep.subr.mxu0 %v914
    %1122 = vmatpush1.msra.mxu0 %v913
    %1123 = vmatprep.subr.mxu0 %v918
    %1124 = vmatpush1.msra.mxu0 %v917
    %1125 = vmatprep.subr.mxu0 %v922
    %1126 = vmatpush1.msra.mxu0 %v921
    %1127 = vmatprep.subr.mxu0 %v926
    %1128 = vmatpush1.msra.mxu0 %v925
    %1129 = vmatprep.subr.mxu0 %v930
    %1130 = vmatpush1.msra.mxu0 %v929
    %1131 = vmatprep.subr.mxu0 %v934
    %1132 = vmatpush1.msra.mxu0 %v933
    %1133 = vmatprep.subr.mxu0 %v938
    %1134 = vmatpush1.msra.mxu0 %v937
    %1135 = vmatprep.subr.mxu0 %v942
    %1136 = vmatpush1.msra.mxu0 %v941
    %1137 = vmatprep.subr.mxu0 %v946
    %1138 = vmatpush1.msra.mxu0 %v945
    %1139 = vmatprep.subr.mxu0 %v950
    %1140 = vmatpush1.msra.mxu0 %v949
    %1141 = vmatprep.subr.mxu0 %v954
    %1142 = vmatpush1.msra.mxu0 %v953
    %1143 = vmatprep.subr.mxu0 %v958
    %1144 = vmatpush1.msra.mxu0 %v957
    %1145 = vmatprep.subr.mxu0 %v962
    %1146 = vmatpush1.msra.mxu0 %v961
    %1147 = vmatprep.subr.mxu0 %v966
    %1148 = vmatpush1.msra.mxu0 %v965
    %1149 = vmatprep.subr.mxu0 %v970
    %1150 = vmatpush1.msra.mxu0 %v969
    %1151 = vmatprep.subr.mxu0 %v974
    %1152 = vmatpush1.msra.mxu0 %v973
    %1153 = vmatprep.subr.mxu0 %v978
    %1154 = vmatpush1.msra.mxu0 %v977
    %1155 = vmatprep.subr.mxu0 %v982
    %1156 = vmatpush1.msra.mxu0 %v981
    %1157 = vmatprep.subr.mxu0 %v986
    %1158 = vmatpush1.msra.mxu0 %v985
    %1159 = vmatprep.subr.mxu0 %v990
    %1160 = vmatpush1.msra.mxu0 %v989
    %1161 = vmatprep.subr.mxu0 %v994
    %1162 = vmatpush1.msra.mxu0 %v993
    %1163 = vmatprep.subr.mxu0 %v998
    %1164 = vmatpush1.msra.mxu0 %v997
    %1165 = vmatprep.subr.mxu0 %v1002
    %1166 = vmatpush1.msra.mxu0 %v1001
    %1167 = vmatprep.subr.mxu0 %v1006
    %1168 = vmatpush1.msra.mxu0 %v1005
    %1169 = vmatprep.subr.mxu0 %v1010
    %1170 = vmatpush1.msra.mxu0 %v1009
    %1171 = vmatprep.subr.mxu0 %v1014
    %1172 = vmatpush1.msra.mxu0 %v1013
    %1173 = vmatprep.subr.mxu0 %v1018
    %1174 = vmatpush1.msra.mxu0 %v1017
    %1175 = vmatprep.subr.mxu0 %v1022
    %1176 = vmatpush1.msra.mxu0 %v1021
    %1177 = vmatprep.subr.mxu0 %v1026
    %1178 = vmatpush1.msra.mxu0 %v1025
    %1179 = vmatprep.mubr.f32.mxu0 %v899
    %1180 = vmatmul.mubr.f32.gmra.mrb[0].mxu0 %v898
    %v1181 = vpop.f32.mrb[0].mxu0
    %v1182 = vadd.f32 %v1098, %v1181
    %v1183 = vpop.f32.mrb[0].mxu0
    %v1184 = vadd.f32 %v1102, %v1183
    %1185 = vdwg.mxu0
    %1186 = vmatprep.subr.mxu0 %v1030
    %1187 = vmatpush1.msra.mxu0 %v1029
    %1188 = vmatprep.subr.mxu0 %v1034
    %1189 = vmatpush1.msra.mxu0 %v1033
    %1190 = vmatprep.subr.mxu0 %v1038
    %1191 = vmatpush1.msra.mxu0 %v1037
    %1192 = vmatprep.subr.mxu0 %v1042
    %1193 = vmatpush1.msra.mxu0 %v1041
    %1194 = vmatprep.subr.mxu0 %v1046
    %1195 = vmatpush1.msra.mxu0 %v1045
    %1196 = vmatprep.subr.mxu0 %v1050
    %1197 = vmatpush1.msra.mxu0 %v1049
    %1198 = vmatprep.subr.mxu0 %v1054
    %1199 = vmatpush1.msra.mxu0 %v1053
    %1200 = vmatprep.subr.mxu0 %v1058
    %1201 = vmatpush1.msra.mxu0 %v1057
    %1202 = vmatprep.subr.mxu0 %v1062
    %1203 = vmatpush1.msra.mxu0 %v1061
    %1204 = vmatprep.subr.mxu0 %v1066
    %1205 = vmatpush1.msra.mxu0 %v1065
    %1206 = vmatprep.subr.mxu0 %v1070
    %1207 = vmatpush1.msra.mxu0 %v1069
    %1208 = vmatprep.subr.mxu0 %v1074
    %1209 = vmatpush1.msra.mxu0 %v1073
    %1210 = vmatprep.subr.mxu0 %v1078
    %1211 = vmatpush1.msra.mxu0 %v1077
    %1212 = vmatprep.subr.mxu0 %v1082
    %1213 = vmatpush1.msra.mxu0 %v1081
    %1214 = vmatprep.subr.mxu0 %v1086
    %1215 = vmatpush1.msra.mxu0 %v1085
    %1216 = vmatprep.subr.mxu0 %v1090
    %1217 = vmatpush1.msra.mxu0 %v1089
    %1218 = vmatprep.subr.mxu0 0.0
    %1219 = vmatpush1.msra.mxu0 0.0
    %1220 = vmatprep.subr.mxu0 0.0
    %1221 = vmatpush1.msra.mxu0 0.0
    %1222 = vmatprep.subr.mxu0 0.0
    %1223 = vmatpush1.msra.mxu0 0.0
    %1224 = vmatprep.subr.mxu0 0.0
    %1225 = vmatpush1.msra.mxu0 0.0
    %1226 = vmatprep.subr.mxu0 0.0
    %1227 = vmatpush1.msra.mxu0 0.0
    %1228 = vmatprep.subr.mxu0 0.0
    %1229 = vmatpush1.msra.mxu0 0.0
    %1230 = vmatprep.subr.mxu0 0.0
    %1231 = vmatpush1.msra.mxu0 0.0
    %1232 = vmatprep.subr.mxu0 0.0
    %1233 = vmatpush1.msra.mxu0 0.0
    %1234 = vmatprep.subr.mxu0 0.0
    %1235 = vmatpush1.msra.mxu0 0.0
    %1236 = vmatprep.subr.mxu0 0.0
    %1237 = vmatpush1.msra.mxu0 0.0
    %1238 = vmatprep.subr.mxu0 0.0
    %1239 = vmatpush1.msra.mxu0 0.0
    %1240 = vmatprep.subr.mxu0 0.0
    %1241 = vmatpush1.msra.mxu0 0.0
    %1242 = vmatprep.subr.mxu0 0.0
    %1243 = vmatpush1.msra.mxu0 0.0
    %1244 = vmatprep.subr.mxu0 0.0
    %1245 = vmatpush1.msra.mxu0 0.0
    %1246 = vmatprep.subr.mxu0 0.0
    %1247 = vmatpush1.msra.mxu0 0.0
    %1248 = vmatprep.subr.mxu0 0.0
    %1249 = vmatpush1.msra.mxu0 0.0
    %1250 = vmatprep.mubr.f32.mxu0 0.0
    %1251 = vmatmul.mubr.f32.gmra.mrb[0].mxu0 %v900
    %v1252 = vpop.f32.mrb[0].mxu0
    %v1253 = vadd.f32 %v1182, %v1252
    %v1254 = vpop.f32.mrb[0].mxu0
    %v1255 = vadd.f32 %v1184, %v1254
    %1256 = vdwg.mxu0
    %1257 = vmatprep.subr.mxu0 %v904
    %1258 = vmatpush1.msra.mxu0 %v903
    %1259 = vmatprep.subr.mxu0 %v908
    %1260 = vmatpush1.msra.mxu0 %v907
    %1261 = vmatprep.subr.mxu0 %v912
    %1262 = vmatpush1.msra.mxu0 %v911
    %1263 = vmatprep.subr.mxu0 %v916
    %1264 = vmatpush1.msra.mxu0 %v915
    %1265 = vmatprep.subr.mxu0 %v920
    %1266 = vmatpush1.msra.mxu0 %v919
    %1267 = vmatprep.subr.mxu0 %v924
    %1268 = vmatpush1.msra.mxu0 %v923
    %1269 = vmatprep.subr.mxu0 %v928
    %1270 = vmatpush1.msra.mxu0 %v927
    %1271 = vmatprep.subr.mxu0 %v932
    %1272 = vmatpush1.msra.mxu0 %v931
    %1273 = vmatprep.subr.mxu0 %v936
    %1274 = vmatpush1.msra.mxu0 %v935
    %1275 = vmatprep.subr.mxu0 %v940
    %1276 = vmatpush1.msra.mxu0 %v939
    %1277 = vmatprep.subr.mxu0 %v944
    %1278 = vmatpush1.msra.mxu0 %v943
    %1279 = vmatprep.subr.mxu0 %v948
    %1280 = vmatpush1.msra.mxu0 %v947
    %1281 = vmatprep.subr.mxu0 %v952
    %1282 = vmatpush1.msra.mxu0 %v951
    %1283 = vmatprep.subr.mxu0 %v956
    %1284 = vmatpush1.msra.mxu0 %v955
    %1285 = vmatprep.subr.mxu0 %v960
    %1286 = vmatpush1.msra.mxu0 %v959
    %1287 = vmatprep.subr.mxu0 %v964
    %1288 = vmatpush1.msra.mxu0 %v963
    %1289 = vmatprep.subr.mxu0 %v968
    %1290 = vmatpush1.msra.mxu0 %v967
    %1291 = vmatprep.subr.mxu0 %v972
    %1292 = vmatpush1.msra.mxu0 %v971
    %1293 = vmatprep.subr.mxu0 %v976
    %1294 = vmatpush1.msra.mxu0 %v975
    %1295 = vmatprep.subr.mxu0 %v980
    %1296 = vmatpush1.msra.mxu0 %v979
    %1297 = vmatprep.subr.mxu0 %v984
    %1298 = vmatpush1.msra.mxu0 %v983
    %1299 = vmatprep.subr.mxu0 %v988
    %1300 = vmatpush1.msra.mxu0 %v987
    %1301 = vmatprep.subr.mxu0 %v992
    %1302 = vmatpush1.msra.mxu0 %v991
    %1303 = vmatprep.subr.mxu0 %v996
    %1304 = vmatpush1.msra.mxu0 %v995
    %1305 = vmatprep.subr.mxu0 %v1000
    %1306 = vmatpush1.msra.mxu0 %v999
    %1307 = vmatprep.subr.mxu0 %v1004
    %1308 = vmatpush1.msra.mxu0 %v1003
    %1309 = vmatprep.subr.mxu0 %v1008
    %1310 = vmatpush1.msra.mxu0 %v1007
    %1311 = vmatprep.subr.mxu0 %v1012
    %1312 = vmatpush1.msra.mxu0 %v1011
    %1313 = vmatprep.subr.mxu0 %v1016
    %1314 = vmatpush1.msra.mxu0 %v1015
    %1315 = vmatprep.subr.mxu0 %v1020
    %1316 = vmatpush1.msra.mxu0 %v1019
    %1317 = vmatprep.subr.mxu0 %v1024
    %1318 = vmatpush1.msra.mxu0 %v1023
    %1319 = vmatprep.subr.mxu0 %v1028
    %1320 = vmatpush1.msra.mxu0 %v1027
    %1321 = vmatprep.mubr.f32.mxu0 %v899
    %1322 = vmatmul.mubr.f32.gmra.mrb[0].mxu0 %v898
    %v1323 = vpop.f32.mrb[0].mxu0
    %v1324 = vadd.f32 %v1106, %v1323
    %v1325 = vpop.f32.mrb[0].mxu0
    %v1326 = vadd.f32 %v1110, %v1325
    %1327 = vdwg.mxu0
    %1328 = vmatprep.subr.mxu0 %v1032
    %1329 = vmatpush1.msra.mxu0 %v1031
    %1330 = vmatprep.subr.mxu0 %v1036
    %1331 = vmatpush1.msra.mxu0 %v1035
    %1332 = vmatprep.subr.mxu0 %v1040
    %1333 = vmatpush1.msra.mxu0 %v1039
    %1334 = vmatprep.subr.mxu0 %v1044
    %1335 = vmatpush1.msra.mxu0 %v1043
    %1336 = vmatprep.subr.mxu0 %v1048
    %1337 = vmatpush1.msra.mxu0 %v1047
    %1338 = vmatprep.subr.mxu0 %v1052
    %1339 = vmatpush1.msra.mxu0 %v1051
    %1340 = vmatprep.subr.mxu0 %v1056
    %1341 = vmatpush1.msra.mxu0 %v1055
    %1342 = vmatprep.subr.mxu0 %v1060
    %1343 = vmatpush1.msra.mxu0 %v1059
    %1344 = vmatprep.subr.mxu0 %v1064
    %1345 = vmatpush1.msra.mxu0 %v1063
    %1346 = vmatprep.subr.mxu0 %v1068
    %1347 = vmatpush1.msra.mxu0 %v1067
    %1348 = vmatprep.subr.mxu0 %v1072
    %1349 = vmatpush1.msra.mxu0 %v1071
    %1350 = vmatprep.subr.mxu0 %v1076
    %1351 = vmatpush1.msra.mxu0 %v1075
    %1352 = vmatprep.subr.mxu0 %v1080
    %1353 = vmatpush1.msra.mxu0 %v1079
    %1354 = vmatprep.subr.mxu0 %v1084
    %1355 = vmatpush1.msra.mxu0 %v1083
    %1356 = vmatprep.subr.mxu0 %v1088
    %1357 = vmatpush1.msra.mxu0 %v1087
    %1358 = vmatprep.subr.mxu0 %v1092
    %1359 = vmatpush1.msra.mxu0 %v1091
    %1360 = vmatprep.subr.mxu0 0.0
    %1361 = vmatpush1.msra.mxu0 0.0
    %1362 = vmatprep.subr.mxu0 0.0
    %1363 = vmatpush1.msra.mxu0 0.0
    %1364 = vmatprep.subr.mxu0 0.0
    %1365 = vmatpush1.msra.mxu0 0.0
    %1366 = vmatprep.subr.mxu0 0.0
    %1367 = vmatpush1.msra.mxu0 0.0
    %1368 = vmatprep.subr.mxu0 0.0
    %1369 = vmatpush1.msra.mxu0 0.0
    %1370 = vmatprep.subr.mxu0 0.0
    %1371 = vmatpush1.msra.mxu0 0.0
    %1372 = vmatprep.subr.mxu0 0.0
    %1373 = vmatpush1.msra.mxu0 0.0
    %1374 = vmatprep.subr.mxu0 0.0
    %1375 = vmatpush1.msra.mxu0 0.0
    %1376 = vmatprep.subr.mxu0 0.0
    %1377 = vmatpush1.msra.mxu0 0.0
    %1378 = vmatprep.subr.mxu0 0.0
    %1379 = vmatpush1.msra.mxu0 0.0
    %1380 = vmatprep.subr.mxu0 0.0
    %1381 = vmatpush1.msra.mxu0 0.0
    %1382 = vmatprep.subr.mxu0 0.0
    %1383 = vmatpush1.msra.mxu0 0.0
    %1384 = vmatprep.subr.mxu0 0.0
    %1385 = vmatpush1.msra.mxu0 0.0
    %1386 = vmatprep.subr.mxu0 0.0
    %1387 = vmatpush1.msra.mxu0 0.0
    %1388 = vmatprep.subr.mxu0 0.0
    %1389 = vmatpush1.msra.mxu0 0.0
    %1390 = vmatprep.subr.mxu0 0.0
    %1391 = vmatpush1.msra.mxu0 0.0
    %1392 = vmatprep.mubr.f32.mxu0 0.0
    %1393 = vmatmul.mubr.f32.gmra.mrb[0].mxu0 %v900
    %v1394 = vpop.f32.mrb[0].mxu0
    %v1395 = vadd.f32 %v1324, %v1394
    %v1396 = vpop.f32.mrb[0].mxu0
    %v1397 = vadd.f32 %v1326, %v1396
    %1398 = vdwg.mxu0
    %v1399 = vmax.f32 %v1253, 0.0
    %v1400 = vmax.f32 %v1255, 0.0
    %v1401 = vmax.f32 %v1395, 0.0
    %v1402 = vmax.f32 %v1397, 0.0
    %v1403 = vld [vmem:[#allocation10] sm:$0xff]
    %v1404 = vld [vmem:[#allocation10 + $0x8] sm:$0xff]
    %v1405 = vld [vmem:[#allocation10 + $0x10] sm:$0xff]
    %v1406 = vld [vmem:[#allocation10 + $0x18] sm:$0xff]
    %v1407 = vld [vmem:[#allocation10 + $0x20] sm:$0xff]
    %v1408 = vld [vmem:[#allocation10 + $0x28] sm:$0xff]
    %v1409 = vld [vmem:[#allocation10 + $0x30] sm:$0xff]
    %v1410 = vld [vmem:[#allocation10 + $0x38] sm:$0xff]
    %v1411 = vld [vmem:[#allocation10 + $0x40] sm:$0xff]
    %v1412 = vld [vmem:[#allocation10 + $0x48] sm:$0xff]
    %v1413 = vld [vmem:[#allocation10 + $0x50] sm:$0xff]
    %v1414 = vld [vmem:[#allocation10 + $0x58] sm:$0xff]
    %v1415 = vld [vmem:[#allocation10 + $0x60] sm:$0xff]
    %v1416 = vld [vmem:[#allocation10 + $0x68] sm:$0xff]
    %v1417 = vld [vmem:[#allocation10 + $0x70] sm:$0xff]
    %v1418 = vld [vmem:[#allocation10 + $0x78] sm:$0xff]
    %v1419 = vld [vmem:[#allocation10 + $0x80] sm:$0xff]
    %v1420 = vld [vmem:[#allocation10 + $0x88] sm:$0xff]
    %v1421 = vld [vmem:[#allocation10 + $0x90] sm:$0xff]
    %v1422 = vld [vmem:[#allocation10 + $0x98] sm:$0xff]
    %v1423 = vld [vmem:[#allocation10 + $0xa0] sm:$0xff]
    %v1424 = vld [vmem:[#allocation10 + $0xa8] sm:$0xff]
    %v1425 = vld [vmem:[#allocation10 + $0xb0] sm:$0xff]
    %v1426 = vld [vmem:[#allocation10 + $0xb8] sm:$0xff]
    %v1427 = vld [vmem:[#allocation10 + $0xc0] sm:$0xff]
    %v1428 = vld [vmem:[#allocation10 + $0xc8] sm:$0xff]
    %v1429 = vld [vmem:[#allocation10 + $0xd0] sm:$0xff]
    %v1430 = vld [vmem:[#allocation10 + $0xd8] sm:$0xff]
    %v1431 = vld [vmem:[#allocation10 + $0xe0] sm:$0xff]
    %v1432 = vld [vmem:[#allocation10 + $0xe8] sm:$0xff]
    %v1433 = vld [vmem:[#allocation10 + $0xf0] sm:$0xff]
    %v1434 = vld [vmem:[#allocation10 + $0xf8] sm:$0xff]
    %v1435 = vld [vmem:[#allocation10 + $0x100] sm:$0xff]
    %v1436 = vld [vmem:[#allocation10 + $0x108] sm:$0xff]
    %v1437 = vld [vmem:[#allocation10 + $0x110] sm:$0xff]
    %v1438 = vld [vmem:[#allocation10 + $0x118] sm:$0xff]
    %v1439 = vld [vmem:[#allocation10 + $0x120] sm:$0xff]
    %v1440 = vld [vmem:[#allocation10 + $0x128] sm:$0xff]
    %v1441 = vld [vmem:[#allocation10 + $0x130] sm:$0xff]
    %v1442 = vld [vmem:[#allocation10 + $0x138] sm:$0xff]
    %v1443 = vld [vmem:[#allocation10 + $0x140] sm:$0xff]
    %v1444 = vld [vmem:[#allocation10 + $0x148] sm:$0xff]
    %v1445 = vld [vmem:[#allocation10 + $0x150] sm:$0xff]
    %v1446 = vld [vmem:[#allocation10 + $0x158] sm:$0xff]
    %v1447 = vld [vmem:[#allocation10 + $0x160] sm:$0xff]
    %v1448 = vld [vmem:[#allocation10 + $0x168] sm:$0xff]
    %v1449 = vld [vmem:[#allocation10 + $0x170] sm:$0xff]
    %v1450 = vld [vmem:[#allocation10 + $0x178] sm:$0xff]
    %v1451 = vld [vmem:[#allocation10 + $0x180] sm:$0xff]
    %v1452 = vld [vmem:[#allocation10 + $0x188] sm:$0xff]
    %v1453 = vld [vmem:[#allocation10 + $0x190] sm:$0xff]
    %v1454 = vld [vmem:[#allocation10 + $0x198] sm:$0xff]
    %v1455 = vld [vmem:[#allocation10 + $0x1a0] sm:$0xff]
    %v1456 = vld [vmem:[#allocation10 + $0x1a8] sm:$0xff]
    %v1457 = vld [vmem:[#allocation10 + $0x1b0] sm:$0xff]
    %v1458 = vld [vmem:[#allocation10 + $0x1b8] sm:$0xff]
    %v1459 = vld [vmem:[#allocation10 + $0x1c0] sm:$0xff]
    %v1460 = vld [vmem:[#allocation10 + $0x1c8] sm:$0xff]
    %v1461 = vld [vmem:[#allocation10 + $0x1d0] sm:$0xff]
    %v1462 = vld [vmem:[#allocation10 + $0x1d8] sm:$0xff]
    %v1463 = vld [vmem:[#allocation10 + $0x1e0] sm:$0xff]
    %v1464 = vld [vmem:[#allocation10 + $0x1e8] sm:$0xff]
    %v1465 = vld [vmem:[#allocation10 + $0x1f0] sm:$0xff]
    %v1466 = vld [vmem:[#allocation10 + $0x1f8] sm:$0xff]
    %v1467 = vld [vmem:[#allocation10 + $0x200] sm:$0xff]
    %v1468 = vld [vmem:[#allocation10 + $0x208] sm:$0xff]
    %v1469 = vld [vmem:[#allocation10 + $0x210] sm:$0xff]
    %v1470 = vld [vmem:[#allocation10 + $0x218] sm:$0xff]
    %v1471 = vld [vmem:[#allocation10 + $0x220] sm:$0xff]
    %v1472 = vld [vmem:[#allocation10 + $0x228] sm:$0xff]
    %v1473 = vld [vmem:[#allocation10 + $0x230] sm:$0xff]
    %v1474 = vld [vmem:[#allocation10 + $0x238] sm:$0xff]
    %v1475 = vld [vmem:[#allocation10 + $0x240] sm:$0xff]
    %v1476 = vld [vmem:[#allocation10 + $0x248] sm:$0xff]
    %v1477 = vld [vmem:[#allocation10 + $0x250] sm:$0xff]
    %v1478 = vld [vmem:[#allocation10 + $0x258] sm:$0xff]
    %v1479 = vld [vmem:[#allocation10 + $0x260] sm:$0xff]
    %v1480 = vld [vmem:[#allocation10 + $0x268] sm:$0xff]
    %v1481 = vld [vmem:[#allocation10 + $0x270] sm:$0xff]
    %v1482 = vld [vmem:[#allocation10 + $0x278] sm:$0xff]
    %v1483 = vld [vmem:[#allocation10 + $0x280] sm:$0xff]
    %v1484 = vld [vmem:[#allocation10 + $0x288] sm:$0xff]
    %v1485 = vld [vmem:[#allocation10 + $0x290] sm:$0xff]
    %v1486 = vld [vmem:[#allocation10 + $0x298] sm:$0xff]
    %v1487 = vld [vmem:[#allocation10 + $0x2a0] sm:$0xff]
    %v1488 = vld [vmem:[#allocation10 + $0x2a8] sm:$0xff]
    %v1489 = vld [vmem:[#allocation10 + $0x2b0] sm:$0xff]
    %v1490 = vld [vmem:[#allocation10 + $0x2b8] sm:$0xff]
    %v1491 = vld [vmem:[#allocation10 + $0x2c0] sm:$0xff]
    %v1492 = vld [vmem:[#allocation10 + $0x2c8] sm:$0xff]
    %v1493 = vld [vmem:[#allocation10 + $0x2d0] sm:$0xff]
    %v1494 = vld [vmem:[#allocation10 + $0x2d8] sm:$0xff]
    %v1495 = vld [vmem:[#allocation10 + $0x2e0] sm:$0xff]
    %v1496 = vld [vmem:[#allocation10 + $0x2e8] sm:$0xff]
    %v1497 = vld [vmem:[#allocation10 + $0x2f0] sm:$0xff]
    %v1498 = vld [vmem:[#allocation10 + $0x2f8] sm:$0xff]
    %v1499 = vld [vmem:[#allocation10 + $0x300] sm:$0xff]
    %v1500 = vld [vmem:[#allocation10 + $0x308] sm:$0xff]
    %v1501 = vld [vmem:[#allocation10 + $0x310] sm:$0xff]
    %v1502 = vld [vmem:[#allocation10 + $0x318] sm:$0xff]
    %v1503 = vld [vmem:[#allocation10 + $0x320] sm:$0xff]
    %v1504 = vld [vmem:[#allocation10 + $0x328] sm:$0xff]
    %v1505 = vld [vmem:[#allocation10 + $0x330] sm:$0xff]
    %v1506 = vld [vmem:[#allocation10 + $0x338] sm:$0xff]
    %v1507 = vld [vmem:[#allocation10 + $0x340] sm:$0xff]
    %v1508 = vld [vmem:[#allocation10 + $0x348] sm:$0xff]
    %v1509 = vld [vmem:[#allocation10 + $0x350] sm:$0xff]
    %v1510 = vld [vmem:[#allocation10 + $0x358] sm:$0xff]
    %v1511 = vld [vmem:[#allocation10 + $0x360] sm:$0xff]
    %v1512 = vld [vmem:[#allocation10 + $0x368] sm:$0xff]
    %v1513 = vld [vmem:[#allocation10 + $0x370] sm:$0xff]
    %v1514 = vld [vmem:[#allocation10 + $0x378] sm:$0xff]
    %v1515 = vld [vmem:[#allocation10 + $0x380] sm:$0xff]
    %v1516 = vld [vmem:[#allocation10 + $0x388] sm:$0xff]
    %v1517 = vld [vmem:[#allocation10 + $0x390] sm:$0xff]
    %v1518 = vld [vmem:[#allocation10 + $0x398] sm:$0xff]
    %v1519 = vld [vmem:[#allocation10 + $0x3a0] sm:$0xff]
    %v1520 = vld [vmem:[#allocation10 + $0x3a8] sm:$0xff]
    %v1521 = vld [vmem:[#allocation10 + $0x3b0] sm:$0xff]
    %v1522 = vld [vmem:[#allocation10 + $0x3b8] sm:$0xff]
    %v1523 = vld [vmem:[#allocation10 + $0x3c0] sm:$0xff]
    %v1524 = vld [vmem:[#allocation10 + $0x3c8] sm:$0xff]
    %v1525 = vld [vmem:[#allocation10 + $0x3d0] sm:$0xff]
    %v1526 = vld [vmem:[#allocation10 + $0x3d8] sm:$0xff]
    %v1527 = vld [vmem:[#allocation10 + $0x3e0] sm:$0xff]
    %v1528 = vld [vmem:[#allocation10 + $0x3e8] sm:$0xff]
    %v1529 = vld [vmem:[#allocation10 + $0x3f0] sm:$0xff]
    %v1530 = vld [vmem:[#allocation10 + $0x3f8] sm:$0xff]
    %v1531 = vld [vmem:[%s8] sm:$0x3]
    %v1533 = vlaneseq
    %v1534 = vshrl.u32 %v1533, 7
    %v1535 = vsub.s32 0, %v1534
    %v1536 = vrot.slane %v1531, %v1535
    %v1537 = vlaneseq
    %v1538 = vshrl.u32 %v1537, 7
    %v1539 = vsub.s32 1, %v1538
    %v1540 = vrot.slane %v1531, %v1539
    %1543 = vmatprep.subr.mxu0 %v1404
    %1544 = vmatpush1.msra.mxu0 %v1403
    %1545 = vmatprep.subr.mxu0 %v1406
    %1546 = vmatpush1.msra.mxu0 %v1405
    %1547 = vmatprep.subr.mxu0 %v1408
    %1548 = vmatpush1.msra.mxu0 %v1407
    %1549 = vmatprep.subr.mxu0 %v1410
    %1550 = vmatpush1.msra.mxu0 %v1409
    %1551 = vmatprep.subr.mxu0 %v1412
    %1552 = vmatpush1.msra.mxu0 %v1411
    %1553 = vmatprep.subr.mxu0 %v1414
    %1554 = vmatpush1.msra.mxu0 %v1413
    %1555 = vmatprep.subr.mxu0 %v1416
    %1556 = vmatpush1.msra.mxu0 %v1415
    %1557 = vmatprep.subr.mxu0 %v1418
    %1558 = vmatpush1.msra.mxu0 %v1417
    %1559 = vmatprep.subr.mxu0 %v1420
    %1560 = vmatpush1.msra.mxu0 %v1419
    %1561 = vmatprep.subr.mxu0 %v1422
    %1562 = vmatpush1.msra.mxu0 %v1421
    %1563 = vmatprep.subr.mxu0 %v1424
    %1564 = vmatpush1.msra.mxu0 %v1423
    %1565 = vmatprep.subr.mxu0 %v1426
    %1566 = vmatpush1.msra.mxu0 %v1425
    %1567 = vmatprep.subr.mxu0 %v1428
    %1568 = vmatpush1.msra.mxu0 %v1427
    %1569 = vmatprep.subr.mxu0 %v1430
    %1570 = vmatpush1.msra.mxu0 %v1429
    %1571 = vmatprep.subr.mxu0 %v1432
    %1572 = vmatpush1.msra.mxu0 %v1431
    %1573 = vmatprep.subr.mxu0 %v1434
    %1574 = vmatpush1.msra.mxu0 %v1433
    %1575 = vmatprep.subr.mxu0 %v1436
    %1576 = vmatpush1.msra.mxu0 %v1435
    %1577 = vmatprep.subr.mxu0 %v1438
    %1578 = vmatpush1.msra.mxu0 %v1437
    %1579 = vmatprep.subr.mxu0 %v1440
    %1580 = vmatpush1.msra.mxu0 %v1439
    %1581 = vmatprep.subr.mxu0 %v1442
    %1582 = vmatpush1.msra.mxu0 %v1441
    %1583 = vmatprep.subr.mxu0 %v1444
    %1584 = vmatpush1.msra.mxu0 %v1443
    %1585 = vmatprep.subr.mxu0 %v1446
    %1586 = vmatpush1.msra.mxu0 %v1445
    %1587 = vmatprep.subr.mxu0 %v1448
    %1588 = vmatpush1.msra.mxu0 %v1447
    %1589 = vmatprep.subr.mxu0 %v1450
    %1590 = vmatpush1.msra.mxu0 %v1449
    %1591 = vmatprep.subr.mxu0 %v1452
    %1592 = vmatpush1.msra.mxu0 %v1451
    %1593 = vmatprep.subr.mxu0 %v1454
    %1594 = vmatpush1.msra.mxu0 %v1453
    %1595 = vmatprep.subr.mxu0 %v1456
    %1596 = vmatpush1.msra.mxu0 %v1455
    %1597 = vmatprep.subr.mxu0 %v1458
    %1598 = vmatpush1.msra.mxu0 %v1457
    %1599 = vmatprep.subr.mxu0 %v1460
    %1600 = vmatpush1.msra.mxu0 %v1459
    %1601 = vmatprep.subr.mxu0 %v1462
    %1602 = vmatpush1.msra.mxu0 %v1461
    %1603 = vmatprep.subr.mxu0 %v1464
    %1604 = vmatpush1.msra.mxu0 %v1463
    %1605 = vmatprep.subr.mxu0 %v1466
    %1606 = vmatpush1.msra.mxu0 %v1465
    %1607 = vmatprep.mubr.f32.mxu0 %v1400
    %1608 = vmatmul.mubr.f32.gmra.mrb[0].mxu0 %v1399
    %v1609 = vpop.f32.mrb[0].mxu0
    %v1610 = vadd.f32 %v1536, %v1609
    %v1611 = vpop.f32.mrb[0].mxu0
    %v1612 = vadd.f32 %v1540, %v1611
    %1613 = vdwg.mxu0
    %1614 = vmatprep.subr.mxu0 %v1468
    %1615 = vmatpush1.msra.mxu0 %v1467
    %1616 = vmatprep.subr.mxu0 %v1470
    %1617 = vmatpush1.msra.mxu0 %v1469
    %1618 = vmatprep.subr.mxu0 %v1472
    %1619 = vmatpush1.msra.mxu0 %v1471
    %1620 = vmatprep.subr.mxu0 %v1474
    %1621 = vmatpush1.msra.mxu0 %v1473
    %1622 = vmatprep.subr.mxu0 %v1476
    %1623 = vmatpush1.msra.mxu0 %v1475
    %1624 = vmatprep.subr.mxu0 %v1478
    %1625 = vmatpush1.msra.mxu0 %v1477
    %1626 = vmatprep.subr.mxu0 %v1480
    %1627 = vmatpush1.msra.mxu0 %v1479
    %1628 = vmatprep.subr.mxu0 %v1482
    %1629 = vmatpush1.msra.mxu0 %v1481
    %1630 = vmatprep.subr.mxu0 %v1484
    %1631 = vmatpush1.msra.mxu0 %v1483
    %1632 = vmatprep.subr.mxu0 %v1486
    %1633 = vmatpush1.msra.mxu0 %v1485
    %1634 = vmatprep.subr.mxu0 %v1488
    %1635 = vmatpush1.msra.mxu0 %v1487
    %1636 = vmatprep.subr.mxu0 %v1490
    %1637 = vmatpush1.msra.mxu0 %v1489
    %1638 = vmatprep.subr.mxu0 %v1492
    %1639 = vmatpush1.msra.mxu0 %v1491
    %1640 = vmatprep.subr.mxu0 %v1494
    %1641 = vmatpush1.msra.mxu0 %v1493
    %1642 = vmatprep.subr.mxu0 %v1496
    %1643 = vmatpush1.msra.mxu0 %v1495
    %1644 = vmatprep.subr.mxu0 %v1498
    %1645 = vmatpush1.msra.mxu0 %v1497
    %1646 = vmatprep.subr.mxu0 %v1500
    %1647 = vmatpush1.msra.mxu0 %v1499
    %1648 = vmatprep.subr.mxu0 %v1502
    %1649 = vmatpush1.msra.mxu0 %v1501
    %1650 = vmatprep.subr.mxu0 %v1504
    %1651 = vmatpush1.msra.mxu0 %v1503
    %1652 = vmatprep.subr.mxu0 %v1506
    %1653 = vmatpush1.msra.mxu0 %v1505
    %1654 = vmatprep.subr.mxu0 %v1508
    %1655 = vmatpush1.msra.mxu0 %v1507
    %1656 = vmatprep.subr.mxu0 %v1510
    %1657 = vmatpush1.msra.mxu0 %v1509
    %1658 = vmatprep.subr.mxu0 %v1512
    %1659 = vmatpush1.msra.mxu0 %v1511
    %1660 = vmatprep.subr.mxu0 %v1514
    %1661 = vmatpush1.msra.mxu0 %v1513
    %1662 = vmatprep.subr.mxu0 %v1516
    %1663 = vmatpush1.msra.mxu0 %v1515
    %1664 = vmatprep.subr.mxu0 %v1518
    %1665 = vmatpush1.msra.mxu0 %v1517
    %1666 = vmatprep.subr.mxu0 %v1520
    %1667 = vmatpush1.msra.mxu0 %v1519
    %1668 = vmatprep.subr.mxu0 %v1522
    %1669 = vmatpush1.msra.mxu0 %v1521
    %1670 = vmatprep.subr.mxu0 %v1524
    %1671 = vmatpush1.msra.mxu0 %v1523
    %1672 = vmatprep.subr.mxu0 %v1526
    %1673 = vmatpush1.msra.mxu0 %v1525
    %1674 = vmatprep.subr.mxu0 %v1528
    %1675 = vmatpush1.msra.mxu0 %v1527
    %1676 = vmatprep.subr.mxu0 %v1530
    %1677 = vmatpush1.msra.mxu0 %v1529
    %1678 = vmatprep.mubr.f32.mxu0 %v1402
    %1679 = vmatmul.mubr.f32.gmra.mrb[0].mxu0 %v1401
    %v1680 = vpop.f32.mrb[0].mxu0
    %v1681 = vadd.f32 %v1610, %v1680
    %v1682 = vpop.f32.mrb[0].mxu0
    %v1683 = vadd.f32 %v1612, %v1682
    %1684 = vdwg.mxu0
    %v1685 = vmax.f32 %v1681, 0.0
    %v1686 = vmax.f32 %v1683, 0.0
    %v1689 = vcombine.low %v1685, %v1686
    %v1691 = vunpack.c.l.s4 1966171168
    %v1692 = vunpack.c.0.s8 %v1691
    %v1693 = vlaneseq
    %v1694 = vshrl.u32 %v1693, 7
    %v1695 = vsub.s32 %v1692, %v1694
    %v1696 = vrot.slane %v1689, %v1695
    %v1698 = vunpack.c.l.s4 1966171168
    %v1699 = vunpack.c.0.s8 %v1698
    %v1700 = vlaneseq
    %v1701 = vshrl.u32 %v1700, 7
    %v1702 = vsub.s32 %v1699, %v1701
    %v1703 = vrot.slane %v1696, %v1702
    %v1705 = vlaneseq
    %vm1706 = vcmp.ge.s32.totalorder %v1705, 0
    %vm1707 = vcmp.lt.s32.totalorder %v1705, 256
    %vm1708 = vmand %vm1706, %vm1707
    %1709 = vst.msk [vmem:[#allocation11] sm:$0x3] %vm1708, %v1703
    // Predicated region
    $region58: #{tpu_custom_call.1} parent=1 // pred_check
      _
    $region59: #{tpu_custom_call.1} parent=1 // pred_check_branch
      %1711 = sbr.rel (0) target = $region61
    $region60: #{tpu_custom_call.1} parent=1 // pred_region
      %s1713 = ssub.s32 32, 32
      %1714 = vsyncadd [#allocation4], %s1713
      %s1716 = sshll.u32 [#allocation11], 4
      %s1717 = int_to_ptr.vmem [resolvable:$true] %s1716
      %1719 = dma.vmem_to_hbm [thread:$0]  %s1717, 32, %s9, [#allocation4]
    $region61: #{tpu_custom_call.1} parent=1 // pred_fallthru
      _
    // Predicated region
    $region62: #{tpu_custom_call.1} parent=1 // pred_check
      _
    $region63: #{tpu_custom_call.1} parent=1 // pred_check_branch
      %1721 = sbr.rel (0) target = $region65
    $region64: #{tpu_custom_call.1} parent=1 // pred_region
      %1722 = dma.done [#allocation4], 32
    $region65: #{tpu_custom_call.1} parent=1 // pred_fallthru
      _
    %1723 = vsyncpa [#allocation3], 1
    %1724 = vsyncpa [#allocation6], 1
    %1725 = vsyncpa [#allocation9], 1
    %1726 = vsyncpa [#allocation4], 1

</llo_original>
